<compile_context>
chip_gen: v7x
topology: tpu7x:2x2x1
jax: 0.10.0
libtpu: 0.0.40
codegen_flags: <defaults>
</compile_context>

<pallas_src>
import numpy as np
import jax
import jax.numpy as jnp
from jax.experimental import pallas as pl
from jax.experimental.pallas import tpu as pltpu

KH = KW = 4     # conv kernel size
C_OUT = 4       # number of filters
POOL = 4        # MaxPool2d(4, 4)


def _round_up(x, m):
    return ((x + m - 1) // m) * m


def _cdiv(a, b):
    return (a + b - 1) // b


def _make_filters() -> np.ndarray:
    """Deterministic filters, exactly as defined in the PyTorch script."""
    filter_vals = np.array(
        [[-1, -1, 1, 1],
         [-1, -1, 1, 1],
         [-1, -1, 1, 1],
         [-1, -1, 1, 1]], dtype=np.float32)
    f1 = filter_vals
    f2 = -f1
    f3 = f1.T
    f4 = -f3
    return np.stack([f1, f2, f3, f4], axis=0)  # (4, 4, 4)


def _make_kernel(W, TILE_N, A_PAD, CM_L, P_L, P_PAD):
    """Build the kernel with all layout constants closed over (static)."""
    n_taps = KH * KW

    def net_kernel(w_ref, xf_ref, conv_ref, act_ref, pool_ref):
        # w_ref   : SMEM (C_OUT*KH*KW,) f32 — scalar weight table
        # xf_ref  : VMEM (TILE_N, X_L)        — zero-padded flattened images
        # conv_ref: VMEM (C_OUT*TILE_N, A_PAD) — sublane-packed conv slab
        # act_ref : VMEM (C_OUT*TILE_N, A_PAD) — sublane-packed ReLU slab
        # pool_ref: VMEM (C_OUT*TILE_N, P_PAD) — lane-dense shift-max slab
        #
        # Flat-anchor convention: anchor o = r*W + s; valid conv outputs are
        # the anchors with s < Wo (the wrapper slices the rest away).
        x = xf_ref[...]                                    # (TILE_N, X_L)

        # Hoist the 16 shifted views out of the channel loop (shared taps).
        # TODO(synk): if the bundle dump shows these unaligned slices
        # materializing VMEM copies, switch them to pltpu.roll lane-rotations.
        taps = []
        for kh in range(KH):
            for kw in range(KW):
                off = kh * W + kw
                taps.append(x[:, off:off + A_PAD])         # (TILE_N, A_PAD)

        for c in range(C_OUT):
            rows = pl.ds(c * TILE_N, TILE_N)               # static, contiguous

            # --- conv: 16 scalar*vector MACs on lane-dense rows (VPU) ---
            acc = w_ref[c * n_taps] * taps[0]
            for t in range(1, n_taps):
                acc = acc + w_ref[c * n_taps + t] * taps[t]
            conv_ref[rows, :] = acc

            # --- fused ReLU ---
            a = jnp.maximum(acc, 0.0)
            act_ref[rows, :] = a

            # --- MaxPool2d(4,4) as an elementwise shift-max tree ---
            # column pass: cm[o] = max_{dj<4} a[o+dj]
            cm = a[:, 0:CM_L]
            for dj in range(1, POOL):
                cm = jnp.maximum(cm, a[:, dj:dj + CM_L])
            # row pass: m[o] = max_{di<4} cm[o+di*W]  (m[o] = 4x4 window max)
            m = cm[:, 0:P_L]
            for di in range(1, POOL):
                m = jnp.maximum(m, cm[:, di * W:di * W + P_L])
            # Lane-dense store: pad the valid P_L lanes with already-computed
            # (garbage) data from the activation slab; wrapper slices it away.
            if P_PAD > P_L:
                m = jnp.concatenate([m, a[:, :P_PAD - P_L]], axis=-1)
            pool_ref[rows, :] = m

    return net_kernel


def net_forward(x, weight):
    """x: (N, 1, H, W) f32, weight: (4, 1, 4, 4) f32 -> (conv, act, pooled)."""
    N, Cin, H, W = x.shape
    assert Cin == 1, "Net's conv has in_channels=1"
    Ho, Wo = H - KH + 1, W - KW + 1
    Ph, Pw = Ho // POOL, Wo // POOL
    assert Ho >= POOL and Wo >= POOL

    # Lane-dense layout constants.
    A_L = Ho * W                                  # anchors covering all conv rows
    A_PAD = _round_up(A_L, 128)                   # lane-dense conv/act slab width
    X_L = _round_up(A_PAD + (KH - 1) * W + KW, 128)   # padded flat input width
    rows = POOL * (Ph - 1) + 1                    # last pooled-anchor row + 1
    P_L = rows * W                                # valid pool-anchor slab width
    P_PAD = _round_up(P_L, 128)                   # lane-dense pool store width
    CM_L = P_L + (POOL - 1) * W                   # column-pass intermediate width
    assert CM_L + POOL - 1 <= A_PAD               # pool tree stays inside conv slab
    assert P_PAD <= A_PAD                         # garbage tail source exists
    # Pool invariant: the stride-POOL subsampled anchors never touch the
    # garbage conv columns s >= Wo (so dense-anchor garbage can't win a max).
    assert POOL * Pw <= Wo and POOL * Ph <= Ho

    # --- Batch tiling (sublane packing + v7x-aware granularity) ---------------
    # Per-image tile bytes (input + conv + act + pool, f32), double buffered.
    per_image_bytes = 4 * (X_L + C_OUT * (2 * A_PAD + P_PAD))
    vmem_budget = 24 << 20                        # stay under v7x's 32 MiB scoped default
    max_tile_n = max(8, vmem_budget // (2 * per_image_bytes))
    if N <= 1:
        TILE_N = 1
    else:
        # >= 2 grid steps so v7x's 2nd TensorCore gets work; big tiles amortize
        # the ~0.35 us per-grid-step pipeline overhead.
        TILE_N = int(min(_cdiv(N, 2), max_tile_n, 512))
    G = _cdiv(N, TILE_N)
    N_pad = G * TILE_N                            # remainder handled by zero-padding

    w_flat = jnp.asarray(weight, jnp.float32).reshape(C_OUT * KH * KW)
    x_flat = jnp.asarray(x, jnp.float32).reshape(N, H * W)
    x_flat = jnp.pad(x_flat, ((0, N_pad - N), (0, X_L - H * W)))
    xf3 = x_flat.reshape(G, TILE_N, X_L)

    out_shape = (
        jax.ShapeDtypeStruct((G, C_OUT * TILE_N, A_PAD), jnp.float32),  # conv
        jax.ShapeDtypeStruct((G, C_OUT * TILE_N, A_PAD), jnp.float32),  # act
        jax.ShapeDtypeStruct((G, C_OUT * TILE_N, P_PAD), jnp.float32),  # pool
    )

    conv_d, act_d, pool_d = pl.pallas_call(
        _make_kernel(W, TILE_N, A_PAD, CM_L, P_L, P_PAD),
        out_shape=out_shape,
        grid=(G,),
        in_specs=[
            pl.BlockSpec(memory_space=pltpu.MemorySpace.SMEM),          # weights
            pl.BlockSpec((None, TILE_N, X_L), lambda g: (g, 0, 0)),     # images
        ],
        out_specs=(
            pl.BlockSpec((None, C_OUT * TILE_N, A_PAD), lambda g: (g, 0, 0)),
            pl.BlockSpec((None, C_OUT * TILE_N, A_PAD), lambda g: (g, 0, 0)),
            pl.BlockSpec((None, C_OUT * TILE_N, P_PAD), lambda g: (g, 0, 0)),
        ),
        compiler_params=pltpu.CompilerParams(
            dimension_semantics=("parallel",)),
    )(w_flat, xf3)

    # Pure-indexing post-processing (single fused XLA pass per output): unpack
    # the channel-major sublane packing, drop padded batch rows, drop invalid
    # anchors (s >= Wo), and subsample the pool anchors.
    def _unpack(d, width):
        d = d.reshape(G, C_OUT, TILE_N, width)
        d = jnp.transpose(d, (0, 2, 1, 3)).reshape(G * TILE_N, C_OUT, width)
        return d[:N]

    conv = _unpack(conv_d, A_PAD)[:, :, :A_L].reshape(N, C_OUT, Ho, W)[:, :, :, :Wo]
    act = _unpack(act_d, A_PAD)[:, :, :A_L].reshape(N, C_OUT, Ho, W)[:, :, :, :Wo]
    pool_n = _unpack(pool_d, P_PAD)[:, :, :P_L].reshape(N, C_OUT, rows, W)
    pooled = pool_n[:, :, ::POOL, :POOL * (Pw - 1) + 1:POOL]
    return conv, act, pooled


def reference(x, weight):
    """Plain-JAX reference mirroring the PyTorch forward (same summation order)."""
    N, _, H, W = x.shape
    Ho, Wo = H - KH + 1, W - KW + 1
    Ph, Pw = Ho // POOL, Wo // POOL
    conv = jnp.zeros((N, C_OUT, Ho, Wo), jnp.float32)
    for c in range(C_OUT):
        acc = jnp.zeros((N, Ho, Wo), jnp.float32)
        for kh in range(KH):
            for kw in range(KW):
                acc = acc + weight[c, 0, kh, kw] * x[:, 0, kh:kh + Ho, kw:kw + Wo]
        conv = conv.at[:, c].set(acc)
    act = jnp.maximum(conv, 0.0)
    pooled = act[:, :, :Ph * POOL, :Pw * POOL].reshape(
        N, C_OUT, Ph, POOL, Pw, POOL).max(axis=(3, 5))
    return conv, act, pooled


if __name__ == "__main__":
    key = jax.random.PRNGKey(0)
    # Small shapes consistent with the module: batch=2, 1 input channel, 16x16.
    x = jax.random.normal(key, (2, 1, 16, 16), dtype=jnp.float32)

    filters = _make_filters()                       # (4, 4, 4), deterministic
    weight = jnp.asarray(filters)[:, None, :, :]    # (4, 1, 4, 4) like nn.Parameter

    conv_x, act_x, pool_x = net_forward(x, weight)
    jax.block_until_ready((conv_x, act_x, pool_x))

    assert conv_x.shape == (2, 4, 13, 13)
    assert act_x.shape == (2, 4, 13, 13)
    assert pool_x.shape == (2, 4, 3, 3)

    ref_conv, ref_act, ref_pool = reference(x, weight)
    np.testing.assert_allclose(np.asarray(conv_x), np.asarray(ref_conv), rtol=1e-5, atol=1e-5)
    np.testing.assert_allclose(np.asarray(act_x), np.asarray(ref_act), rtol=1e-5, atol=1e-5)
    np.testing.assert_allclose(np.asarray(pool_x), np.asarray(ref_pool), rtol=1e-5, atol=1e-5)

    print("KERNEL_OK")
</pallas_src>

<mosaic_0001>
module attributes {stable_mosaic.version = 11 : i64} {
  func.func @net_kernel(%arg0: i32, %arg1: memref<64xf32, #tpu.memory_space<smem>>, %arg2: memref<1x1x384xf32, #tpu.memory_space<vmem>>, %arg3: memref<1x4x256xf32, #tpu.memory_space<vmem>>, %arg4: memref<1x4x256xf32, #tpu.memory_space<vmem>>, %arg5: memref<1x4x256xf32, #tpu.memory_space<vmem>>) attributes {dimension_semantics = [#tpu.dimension_semantics<parallel>], iteration_bounds = array<i64: 2>, scalar_prefetch = 0 : i64, scratch_operands = 0 : i64, tpu.core_type = #tpu.core_type<tc>, window_params = [{transform_indices = @transform_0, window_bounds = array<i64: 64>}, {transform_indices = @transform_1, window_bounds = array<i64: 1, 1, 384>}, {transform_indices = @transform_2, window_bounds = array<i64: 1, 4, 256>}, {transform_indices = @transform_3, window_bounds = array<i64: 1, 4, 256>}, {transform_indices = @transform_4, window_bounds = array<i64: 1, 4, 256>}]} {
    %c0 = arith.constant 0 : index
    %c0_0 = arith.constant 0 : index
    %c0_1 = arith.constant 0 : index
    %0 = vector.load %arg2[%c0, %c0_0, %c0_1] : memref<1x1x384xf32, #tpu.memory_space<vmem>>, vector<1x1x384xf32>
    %1 = vector.shape_cast %0 : vector<1x1x384xf32> to vector<1x384xf32>
    %2 = vector.extract_strided_slice %1 {offsets = [0, 0], sizes = [1, 256], strides = [1, 1]} : vector<1x384xf32> to vector<1x256xf32>
    %3 = vector.extract_strided_slice %1 {offsets = [0, 1], sizes = [1, 256], strides = [1, 1]} : vector<1x384xf32> to vector<1x256xf32>
    %4 = vector.extract_strided_slice %1 {offsets = [0, 2], sizes = [1, 256], strides = [1, 1]} : vector<1x384xf32> to vector<1x256xf32>
    %5 = vector.extract_strided_slice %1 {offsets = [0, 3], sizes = [1, 256], strides = [1, 1]} : vector<1x384xf32> to vector<1x256xf32>
    %6 = vector.extract_strided_slice %1 {offsets = [0, 16], sizes = [1, 256], strides = [1, 1]} : vector<1x384xf32> to vector<1x256xf32>
    %7 = vector.extract_strided_slice %1 {offsets = [0, 17], sizes = [1, 256], strides = [1, 1]} : vector<1x384xf32> to vector<1x256xf32>
    %8 = vector.extract_strided_slice %1 {offsets = [0, 18], sizes = [1, 256], strides = [1, 1]} : vector<1x384xf32> to vector<1x256xf32>
    %9 = vector.extract_strided_slice %1 {offsets = [0, 19], sizes = [1, 256], strides = [1, 1]} : vector<1x384xf32> to vector<1x256xf32>
    %10 = vector.extract_strided_slice %1 {offsets = [0, 32], sizes = [1, 256], strides = [1, 1]} : vector<1x384xf32> to vector<1x256xf32>
    %11 = vector.extract_strided_slice %1 {offsets = [0, 33], sizes = [1, 256], strides = [1, 1]} : vector<1x384xf32> to vector<1x256xf32>
    %12 = vector.extract_strided_slice %1 {offsets = [0, 34], sizes = [1, 256], strides = [1, 1]} : vector<1x384xf32> to vector<1x256xf32>
    %13 = vector.extract_strided_slice %1 {offsets = [0, 35], sizes = [1, 256], strides = [1, 1]} : vector<1x384xf32> to vector<1x256xf32>
    %14 = vector.extract_strided_slice %1 {offsets = [0, 48], sizes = [1, 256], strides = [1, 1]} : vector<1x384xf32> to vector<1x256xf32>
    %15 = vector.extract_strided_slice %1 {offsets = [0, 49], sizes = [1, 256], strides = [1, 1]} : vector<1x384xf32> to vector<1x256xf32>
    %16 = vector.extract_strided_slice %1 {offsets = [0, 50], sizes = [1, 256], strides = [1, 1]} : vector<1x384xf32> to vector<1x256xf32>
    %17 = vector.extract_strided_slice %1 {offsets = [0, 51], sizes = [1, 256], strides = [1, 1]} : vector<1x384xf32> to vector<1x256xf32>
    %c0_2 = arith.constant 0 : index
    %18 = memref.load %arg1[%c0_2] : memref<64xf32, #tpu.memory_space<smem>>
    %19 = vector.broadcast %18 : f32 to vector<1x256xf32>
    %20 = arith.mulf %19, %2 : vector<1x256xf32>
    %c1 = arith.constant 1 : index
    %21 = memref.load %arg1[%c1] : memref<64xf32, #tpu.memory_space<smem>>
    %22 = vector.broadcast %21 : f32 to vector<1x256xf32>
    %23 = arith.mulf %22, %3 : vector<1x256xf32>
    %24 = arith.addf %20, %23 : vector<1x256xf32>
    %c2 = arith.constant 2 : index
    %25 = memref.load %arg1[%c2] : memref<64xf32, #tpu.memory_space<smem>>
    %26 = vector.broadcast %25 : f32 to vector<1x256xf32>
    %27 = arith.mulf %26, %4 : vector<1x256xf32>
    %28 = arith.addf %24, %27 : vector<1x256xf32>
    %c3 = arith.constant 3 : index
    %29 = memref.load %arg1[%c3] : memref<64xf32, #tpu.memory_space<smem>>
    %30 = vector.broadcast %29 : f32 to vector<1x256xf32>
    %31 = arith.mulf %30, %5 : vector<1x256xf32>
    %32 = arith.addf %28, %31 : vector<1x256xf32>
    %c4 = arith.constant 4 : index
    %33 = memref.load %arg1[%c4] : memref<64xf32, #tpu.memory_space<smem>>
    %34 = vector.broadcast %33 : f32 to vector<1x256xf32>
    %35 = arith.mulf %34, %6 : vector<1x256xf32>
    %36 = arith.addf %32, %35 : vector<1x256xf32>
    %c5 = arith.constant 5 : index
    %37 = memref.load %arg1[%c5] : memref<64xf32, #tpu.memory_space<smem>>
    %38 = vector.broadcast %37 : f32 to vector<1x256xf32>
    %39 = arith.mulf %38, %7 : vector<1x256xf32>
    %40 = arith.addf %36, %39 : vector<1x256xf32>
    %c6 = arith.constant 6 : index
    %41 = memref.load %arg1[%c6] : memref<64xf32, #tpu.memory_space<smem>>
    %42 = vector.broadcast %41 : f32 to vector<1x256xf32>
    %43 = arith.mulf %42, %8 : vector<1x256xf32>
    %44 = arith.addf %40, %43 : vector<1x256xf32>
    %c7 = arith.constant 7 : index
    %45 = memref.load %arg1[%c7] : memref<64xf32, #tpu.memory_space<smem>>
    %46 = vector.broadcast %45 : f32 to vector<1x256xf32>
    %47 = arith.mulf %46, %9 : vector<1x256xf32>
    %48 = arith.addf %44, %47 : vector<1x256xf32>
    %c8 = arith.constant 8 : index
    %49 = memref.load %arg1[%c8] : memref<64xf32, #tpu.memory_space<smem>>
    %50 = vector.broadcast %49 : f32 to vector<1x256xf32>
    %51 = arith.mulf %50, %10 : vector<1x256xf32>
    %52 = arith.addf %48, %51 : vector<1x256xf32>
    %c9 = arith.constant 9 : index
    %53 = memref.load %arg1[%c9] : memref<64xf32, #tpu.memory_space<smem>>
    %54 = vector.broadcast %53 : f32 to vector<1x256xf32>
    %55 = arith.mulf %54, %11 : vector<1x256xf32>
    %56 = arith.addf %52, %55 : vector<1x256xf32>
    %c10 = arith.constant 10 : index
    %57 = memref.load %arg1[%c10] : memref<64xf32, #tpu.memory_space<smem>>
    %58 = vector.broadcast %57 : f32 to vector<1x256xf32>
    %59 = arith.mulf %58, %12 : vector<1x256xf32>
    %60 = arith.addf %56, %59 : vector<1x256xf32>
    %c11 = arith.constant 11 : index
    %61 = memref.load %arg1[%c11] : memref<64xf32, #tpu.memory_space<smem>>
    %62 = vector.broadcast %61 : f32 to vector<1x256xf32>
    %63 = arith.mulf %62, %13 : vector<1x256xf32>
    %64 = arith.addf %60, %63 : vector<1x256xf32>
    %c12 = arith.constant 12 : index
    %65 = memref.load %arg1[%c12] : memref<64xf32, #tpu.memory_space<smem>>
    %66 = vector.broadcast %65 : f32 to vector<1x256xf32>
    %67 = arith.mulf %66, %14 : vector<1x256xf32>
    %68 = arith.addf %64, %67 : vector<1x256xf32>
    %c13 = arith.constant 13 : index
    %69 = memref.load %arg1[%c13] : memref<64xf32, #tpu.memory_space<smem>>
    %70 = vector.broadcast %69 : f32 to vector<1x256xf32>
    %71 = arith.mulf %70, %15 : vector<1x256xf32>
    %72 = arith.addf %68, %71 : vector<1x256xf32>
    %c14 = arith.constant 14 : index
    %73 = memref.load %arg1[%c14] : memref<64xf32, #tpu.memory_space<smem>>
    %74 = vector.broadcast %73 : f32 to vector<1x256xf32>
    %75 = arith.mulf %74, %16 : vector<1x256xf32>
    %76 = arith.addf %72, %75 : vector<1x256xf32>
    %c15 = arith.constant 15 : index
    %77 = memref.load %arg1[%c15] : memref<64xf32, #tpu.memory_space<smem>>
    %78 = vector.broadcast %77 : f32 to vector<1x256xf32>
    %79 = arith.mulf %78, %17 : vector<1x256xf32>
    %80 = arith.addf %76, %79 : vector<1x256xf32>
    %c0_3 = arith.constant 0 : index
    %c0_4 = arith.constant 0 : index
    %c0_5 = arith.constant 0 : index
    %81 = vector.load %arg3[%c0_3, %c0_4, %c0_5] : memref<1x4x256xf32, #tpu.memory_space<vmem>>, vector<1x1x256xf32>
    %82 = vector.shape_cast %81 : vector<1x1x256xf32> to vector<1x256xf32>
    %83 = vector.shape_cast %80 : vector<1x256xf32> to vector<1x1x256xf32>
    tpu.vector_store %arg3[%c0_3, %c0_4, %c0_5], %83 {strides = array<i32>} : memref<1x4x256xf32, #tpu.memory_space<vmem>>, vector<1x1x256xf32>,
    %cst = arith.constant 0.000000e+00 : f32
    %84 = vector.broadcast %cst : f32 to vector<1x256xf32>
    %85 = arith.maximumf %80, %84 : vector<1x256xf32>
    %c0_6 = arith.constant 0 : index
    %c0_7 = arith.constant 0 : index
    %c0_8 = arith.constant 0 : index
    %86 = vector.load %arg4[%c0_6, %c0_7, %c0_8] : memref<1x4x256xf32, #tpu.memory_space<vmem>>, vector<1x1x256xf32>
    %87 = vector.shape_cast %86 : vector<1x1x256xf32> to vector<1x256xf32>
    %88 = vector.shape_cast %85 : vector<1x256xf32> to vector<1x1x256xf32>
    tpu.vector_store %arg4[%c0_6, %c0_7, %c0_8], %88 {strides = array<i32>} : memref<1x4x256xf32, #tpu.memory_space<vmem>>, vector<1x1x256xf32>,
    %89 = vector.extract_strided_slice %85 {offsets = [0, 0], sizes = [1, 192], strides = [1, 1]} : vector<1x256xf32> to vector<1x192xf32>
    %90 = vector.extract_strided_slice %85 {offsets = [0, 1], sizes = [1, 192], strides = [1, 1]} : vector<1x256xf32> to vector<1x192xf32>
    %91 = arith.maximumf %89, %90 : vector<1x192xf32>
    %92 = vector.extract_strided_slice %85 {offsets = [0, 2], sizes = [1, 192], strides = [1, 1]} : vector<1x256xf32> to vector<1x192xf32>
    %93 = arith.maximumf %91, %92 : vector<1x192xf32>
    %94 = vector.extract_strided_slice %85 {offsets = [0, 3], sizes = [1, 192], strides = [1, 1]} : vector<1x256xf32> to vector<1x192xf32>
    %95 = arith.maximumf %93, %94 : vector<1x192xf32>
    %96 = vector.extract_strided_slice %95 {offsets = [0, 0], sizes = [1, 144], strides = [1, 1]} : vector<1x192xf32> to vector<1x144xf32>
    %97 = vector.extract_strided_slice %95 {offsets = [0, 16], sizes = [1, 144], strides = [1, 1]} : vector<1x192xf32> to vector<1x144xf32>
    %98 = arith.maximumf %96, %97 : vector<1x144xf32>
    %99 = vector.extract_strided_slice %95 {offsets = [0, 32], sizes = [1, 144], strides = [1, 1]} : vector<1x192xf32> to vector<1x144xf32>
    %100 = arith.maximumf %98, %99 : vector<1x144xf32>
    %101 = vector.extract_strided_slice %95 {offsets = [0, 48], sizes = [1, 144], strides = [1, 1]} : vector<1x192xf32> to vector<1x144xf32>
    %102 = arith.maximumf %100, %101 : vector<1x144xf32>
    %103 = vector.extract_strided_slice %85 {offsets = [0, 0], sizes = [1, 112], strides = [1, 1]} : vector<1x256xf32> to vector<1x112xf32>
    %104 = tpu.concatenate %102, %103 in 1 : vector<1x144xf32>, vector<1x112xf32> -> vector<1x256xf32>
    %c0_9 = arith.constant 0 : index
    %c0_10 = arith.constant 0 : index
    %c0_11 = arith.constant 0 : index
    %105 = vector.load %arg5[%c0_9, %c0_10, %c0_11] : memref<1x4x256xf32, #tpu.memory_space<vmem>>, vector<1x1x256xf32>
    %106 = vector.shape_cast %105 : vector<1x1x256xf32> to vector<1x256xf32>
    %107 = vector.shape_cast %104 : vector<1x256xf32> to vector<1x1x256xf32>
    tpu.vector_store %arg5[%c0_9, %c0_10, %c0_11], %107 {strides = array<i32>} : memref<1x4x256xf32, #tpu.memory_space<vmem>>, vector<1x1x256xf32>,
    %c16 = arith.constant 16 : index
    %108 = memref.load %arg1[%c16] : memref<64xf32, #tpu.memory_space<smem>>
    %109 = vector.broadcast %108 : f32 to vector<1x256xf32>
    %110 = arith.mulf %109, %2 : vector<1x256xf32>
    %c17 = arith.constant 17 : index
    %111 = memref.load %arg1[%c17] : memref<64xf32, #tpu.memory_space<smem>>
    %112 = vector.broadcast %111 : f32 to vector<1x256xf32>
    %113 = arith.mulf %112, %3 : vector<1x256xf32>
    %114 = arith.addf %110, %113 : vector<1x256xf32>
    %c18 = arith.constant 18 : index
    %115 = memref.load %arg1[%c18] : memref<64xf32, #tpu.memory_space<smem>>
    %116 = vector.broadcast %115 : f32 to vector<1x256xf32>
    %117 = arith.mulf %116, %4 : vector<1x256xf32>
    %118 = arith.addf %114, %117 : vector<1x256xf32>
    %c19 = arith.constant 19 : index
    %119 = memref.load %arg1[%c19] : memref<64xf32, #tpu.memory_space<smem>>
    %120 = vector.broadcast %119 : f32 to vector<1x256xf32>
    %121 = arith.mulf %120, %5 : vector<1x256xf32>
    %122 = arith.addf %118, %121 : vector<1x256xf32>
    %c20 = arith.constant 20 : index
    %123 = memref.load %arg1[%c20] : memref<64xf32, #tpu.memory_space<smem>>
    %124 = vector.broadcast %123 : f32 to vector<1x256xf32>
    %125 = arith.mulf %124, %6 : vector<1x256xf32>
    %126 = arith.addf %122, %125 : vector<1x256xf32>
    %c21 = arith.constant 21 : index
    %127 = memref.load %arg1[%c21] : memref<64xf32, #tpu.memory_space<smem>>
    %128 = vector.broadcast %127 : f32 to vector<1x256xf32>
    %129 = arith.mulf %128, %7 : vector<1x256xf32>
    %130 = arith.addf %126, %129 : vector<1x256xf32>
    %c22 = arith.constant 22 : index
    %131 = memref.load %arg1[%c22] : memref<64xf32, #tpu.memory_space<smem>>
    %132 = vector.broadcast %131 : f32 to vector<1x256xf32>
    %133 = arith.mulf %132, %8 : vector<1x256xf32>
    %134 = arith.addf %130, %133 : vector<1x256xf32>
    %c23 = arith.constant 23 : index
    %135 = memref.load %arg1[%c23] : memref<64xf32, #tpu.memory_space<smem>>
    %136 = vector.broadcast %135 : f32 to vector<1x256xf32>
    %137 = arith.mulf %136, %9 : vector<1x256xf32>
    %138 = arith.addf %134, %137 : vector<1x256xf32>
    %c24 = arith.constant 24 : index
    %139 = memref.load %arg1[%c24] : memref<64xf32, #tpu.memory_space<smem>>
    %140 = vector.broadcast %139 : f32 to vector<1x256xf32>
    %141 = arith.mulf %140, %10 : vector<1x256xf32>
    %142 = arith.addf %138, %141 : vector<1x256xf32>
    %c25 = arith.constant 25 : index
    %143 = memref.load %arg1[%c25] : memref<64xf32, #tpu.memory_space<smem>>
    %144 = vector.broadcast %143 : f32 to vector<1x256xf32>
    %145 = arith.mulf %144, %11 : vector<1x256xf32>
    %146 = arith.addf %142, %145 : vector<1x256xf32>
    %c26 = arith.constant 26 : index
    %147 = memref.load %arg1[%c26] : memref<64xf32, #tpu.memory_space<smem>>
    %148 = vector.broadcast %147 : f32 to vector<1x256xf32>
    %149 = arith.mulf %148, %12 : vector<1x256xf32>
    %150 = arith.addf %146, %149 : vector<1x256xf32>
    %c27 = arith.constant 27 : index
    %151 = memref.load %arg1[%c27] : memref<64xf32, #tpu.memory_space<smem>>
    %152 = vector.broadcast %151 : f32 to vector<1x256xf32>
    %153 = arith.mulf %152, %13 : vector<1x256xf32>
    %154 = arith.addf %150, %153 : vector<1x256xf32>
    %c28 = arith.constant 28 : index
    %155 = memref.load %arg1[%c28] : memref<64xf32, #tpu.memory_space<smem>>
    %156 = vector.broadcast %155 : f32 to vector<1x256xf32>
    %157 = arith.mulf %156, %14 : vector<1x256xf32>
    %158 = arith.addf %154, %157 : vector<1x256xf32>
    %c29 = arith.constant 29 : index
    %159 = memref.load %arg1[%c29] : memref<64xf32, #tpu.memory_space<smem>>
    %160 = vector.broadcast %159 : f32 to vector<1x256xf32>
    %161 = arith.mulf %160, %15 : vector<1x256xf32>
    %162 = arith.addf %158, %161 : vector<1x256xf32>
    %c30 = arith.constant 30 : index
    %163 = memref.load %arg1[%c30] : memref<64xf32, #tpu.memory_space<smem>>
    %164 = vector.broadcast %163 : f32 to vector<1x256xf32>
    %165 = arith.mulf %164, %16 : vector<1x256xf32>
    %166 = arith.addf %162, %165 : vector<1x256xf32>
    %c31 = arith.constant 31 : index
    %167 = memref.load %arg1[%c31] : memref<64xf32, #tpu.memory_space<smem>>
    %168 = vector.broadcast %167 : f32 to vector<1x256xf32>
    %169 = arith.mulf %168, %17 : vector<1x256xf32>
    %170 = arith.addf %166, %169 : vector<1x256xf32>
    %c0_12 = arith.constant 0 : index
    %c1_13 = arith.constant 1 : index
    %c0_14 = arith.constant 0 : index
    %171 = vector.load %arg3[%c0_12, %c1_13, %c0_14] : memref<1x4x256xf32, #tpu.memory_space<vmem>>, vector<1x1x256xf32>
    %172 = vector.shape_cast %171 : vector<1x1x256xf32> to vector<1x256xf32>
    %173 = vector.shape_cast %170 : vector<1x256xf32> to vector<1x1x256xf32>
    tpu.vector_store %arg3[%c0_12, %c1_13, %c0_14], %173 {strides = array<i32>} : memref<1x4x256xf32, #tpu.memory_space<vmem>>, vector<1x1x256xf32>,
    %cst_15 = arith.constant 0.000000e+00 : f32
    %174 = vector.broadcast %cst_15 : f32 to vector<1x256xf32>
    %175 = arith.maximumf %170, %174 : vector<1x256xf32>
    %c0_16 = arith.constant 0 : index
    %c1_17 = arith.constant 1 : index
    %c0_18 = arith.constant 0 : index
    %176 = vector.load %arg4[%c0_16, %c1_17, %c0_18] : memref<1x4x256xf32, #tpu.memory_space<vmem>>, vector<1x1x256xf32>
    %177 = vector.shape_cast %176 : vector<1x1x256xf32> to vector<1x256xf32>
    %178 = vector.shape_cast %175 : vector<1x256xf32> to vector<1x1x256xf32>
    tpu.vector_store %arg4[%c0_16, %c1_17, %c0_18], %178 {strides = array<i32>} : memref<1x4x256xf32, #tpu.memory_space<vmem>>, vector<1x1x256xf32>,
    %179 = vector.extract_strided_slice %175 {offsets = [0, 0], sizes = [1, 192], strides = [1, 1]} : vector<1x256xf32> to vector<1x192xf32>
    %180 = vector.extract_strided_slice %175 {offsets = [0, 1], sizes = [1, 192], strides = [1, 1]} : vector<1x256xf32> to vector<1x192xf32>
    %181 = arith.maximumf %179, %180 : vector<1x192xf32>
    %182 = vector.extract_strided_slice %175 {offsets = [0, 2], sizes = [1, 192], strides = [1, 1]} : vector<1x256xf32> to vector<1x192xf32>
    %183 = arith.maximumf %181, %182 : vector<1x192xf32>
    %184 = vector.extract_strided_slice %175 {offsets = [0, 3], sizes = [1, 192], strides = [1, 1]} : vector<1x256xf32> to vector<1x192xf32>
    %185 = arith.maximumf %183, %184 : vector<1x192xf32>
    %186 = vector.extract_strided_slice %185 {offsets = [0, 0], sizes = [1, 144], strides = [1, 1]} : vector<1x192xf32> to vector<1x144xf32>
    %187 = vector.extract_strided_slice %185 {offsets = [0, 16], sizes = [1, 144], strides = [1, 1]} : vector<1x192xf32> to vector<1x144xf32>
    %188 = arith.maximumf %186, %187 : vector<1x144xf32>
    %189 = vector.extract_strided_slice %185 {offsets = [0, 32], sizes = [1, 144], strides = [1, 1]} : vector<1x192xf32> to vector<1x144xf32>
    %190 = arith.maximumf %188, %189 : vector<1x144xf32>
    %191 = vector.extract_strided_slice %185 {offsets = [0, 48], sizes = [1, 144], strides = [1, 1]} : vector<1x192xf32> to vector<1x144xf32>
    %192 = arith.maximumf %190, %191 : vector<1x144xf32>
    %193 = vector.extract_strided_slice %175 {offsets = [0, 0], sizes = [1, 112], strides = [1, 1]} : vector<1x256xf32> to vector<1x112xf32>
    %194 = tpu.concatenate %192, %193 in 1 : vector<1x144xf32>, vector<1x112xf32> -> vector<1x256xf32>
    %c0_19 = arith.constant 0 : index
    %c1_20 = arith.constant 1 : index
    %c0_21 = arith.constant 0 : index
    %195 = vector.load %arg5[%c0_19, %c1_20, %c0_21] : memref<1x4x256xf32, #tpu.memory_space<vmem>>, vector<1x1x256xf32>
    %196 = vector.shape_cast %195 : vector<1x1x256xf32> to vector<1x256xf32>
    %197 = vector.shape_cast %194 : vector<1x256xf32> to vector<1x1x256xf32>
    tpu.vector_store %arg5[%c0_19, %c1_20, %c0_21], %197 {strides = array<i32>} : memref<1x4x256xf32, #tpu.memory_space<vmem>>, vector<1x1x256xf32>,
    %c32 = arith.constant 32 : index
    %198 = memref.load %arg1[%c32] : memref<64xf32, #tpu.memory_space<smem>>
    %199 = vector.broadcast %198 : f32 to vector<1x256xf32>
    %200 = arith.mulf %199, %2 : vector<1x256xf32>
    %c33 = arith.constant 33 : index
    %201 = memref.load %arg1[%c33] : memref<64xf32, #tpu.memory_space<smem>>
    %202 = vector.broadcast %201 : f32 to vector<1x256xf32>
    %203 = arith.mulf %202, %3 : vector<1x256xf32>
    %204 = arith.addf %200, %203 : vector<1x256xf32>
    %c34 = arith.constant 34 : index
    %205 = memref.load %arg1[%c34] : memref<64xf32, #tpu.memory_space<smem>>
    %206 = vector.broadcast %205 : f32 to vector<1x256xf32>
    %207 = arith.mulf %206, %4 : vector<1x256xf32>
    %208 = arith.addf %204, %207 : vector<1x256xf32>
    %c35 = arith.constant 35 : index
    %209 = memref.load %arg1[%c35] : memref<64xf32, #tpu.memory_space<smem>>
    %210 = vector.broadcast %209 : f32 to vector<1x256xf32>
    %211 = arith.mulf %210, %5 : vector<1x256xf32>
    %212 = arith.addf %208, %211 : vector<1x256xf32>
    %c36 = arith.constant 36 : index
    %213 = memref.load %arg1[%c36] : memref<64xf32, #tpu.memory_space<smem>>
    %214 = vector.broadcast %213 : f32 to vector<1x256xf32>
    %215 = arith.mulf %214, %6 : vector<1x256xf32>
    %216 = arith.addf %212, %215 : vector<1x256xf32>
    %c37 = arith.constant 37 : index
    %217 = memref.load %arg1[%c37] : memref<64xf32, #tpu.memory_space<smem>>
    %218 = vector.broadcast %217 : f32 to vector<1x256xf32>
    %219 = arith.mulf %218, %7 : vector<1x256xf32>
    %220 = arith.addf %216, %219 : vector<1x256xf32>
    %c38 = arith.constant 38 : index
    %221 = memref.load %arg1[%c38] : memref<64xf32, #tpu.memory_space<smem>>
    %222 = vector.broadcast %221 : f32 to vector<1x256xf32>
    %223 = arith.mulf %222, %8 : vector<1x256xf32>
    %224 = arith.addf %220, %223 : vector<1x256xf32>
    %c39 = arith.constant 39 : index
    %225 = memref.load %arg1[%c39] : memref<64xf32, #tpu.memory_space<smem>>
    %226 = vector.broadcast %225 : f32 to vector<1x256xf32>
    %227 = arith.mulf %226, %9 : vector<1x256xf32>
    %228 = arith.addf %224, %227 : vector<1x256xf32>
    %c40 = arith.constant 40 : index
    %229 = memref.load %arg1[%c40] : memref<64xf32, #tpu.memory_space<smem>>
    %230 = vector.broadcast %229 : f32 to vector<1x256xf32>
    %231 = arith.mulf %230, %10 : vector<1x256xf32>
    %232 = arith.addf %228, %231 : vector<1x256xf32>
    %c41 = arith.constant 41 : index
    %233 = memref.load %arg1[%c41] : memref<64xf32, #tpu.memory_space<smem>>
    %234 = vector.broadcast %233 : f32 to vector<1x256xf32>
    %235 = arith.mulf %234, %11 : vector<1x256xf32>
    %236 = arith.addf %232, %235 : vector<1x256xf32>
    %c42 = arith.constant 42 : index
    %237 = memref.load %arg1[%c42] : memref<64xf32, #tpu.memory_space<smem>>
    %238 = vector.broadcast %237 : f32 to vector<1x256xf32>
    %239 = arith.mulf %238, %12 : vector<1x256xf32>
    %240 = arith.addf %236, %239 : vector<1x256xf32>
    %c43 = arith.constant 43 : index
    %241 = memref.load %arg1[%c43] : memref<64xf32, #tpu.memory_space<smem>>
    %242 = vector.broadcast %241 : f32 to vector<1x256xf32>
    %243 = arith.mulf %242, %13 : vector<1x256xf32>
    %244 = arith.addf %240, %243 : vector<1x256xf32>
    %c44 = arith.constant 44 : index
    %245 = memref.load %arg1[%c44] : memref<64xf32, #tpu.memory_space<smem>>
    %246 = vector.broadcast %245 : f32 to vector<1x256xf32>
    %247 = arith.mulf %246, %14 : vector<1x256xf32>
    %248 = arith.addf %244, %247 : vector<1x256xf32>
    %c45 = arith.constant 45 : index
    %249 = memref.load %arg1[%c45] : memref<64xf32, #tpu.memory_space<smem>>
    %250 = vector.broadcast %249 : f32 to vector<1x256xf32>
    %251 = arith.mulf %250, %15 : vector<1x256xf32>
    %252 = arith.addf %248, %251 : vector<1x256xf32>
    %c46 = arith.constant 46 : index
    %253 = memref.load %arg1[%c46] : memref<64xf32, #tpu.memory_space<smem>>
    %254 = vector.broadcast %253 : f32 to vector<1x256xf32>
    %255 = arith.mulf %254, %16 : vector<1x256xf32>
    %256 = arith.addf %252, %255 : vector<1x256xf32>
    %c47 = arith.constant 47 : index
    %257 = memref.load %arg1[%c47] : memref<64xf32, #tpu.memory_space<smem>>
    %258 = vector.broadcast %257 : f32 to vector<1x256xf32>
    %259 = arith.mulf %258, %17 : vector<1x256xf32>
    %260 = arith.addf %256, %259 : vector<1x256xf32>
    %c0_22 = arith.constant 0 : index
    %c2_23 = arith.constant 2 : index
    %c0_24 = arith.constant 0 : index
    %261 = vector.load %arg3[%c0_22, %c2_23, %c0_24] : memref<1x4x256xf32, #tpu.memory_space<vmem>>, vector<1x1x256xf32>
    %262 = vector.shape_cast %261 : vector<1x1x256xf32> to vector<1x256xf32>
    %263 = vector.shape_cast %260 : vector<1x256xf32> to vector<1x1x256xf32>
    tpu.vector_store %arg3[%c0_22, %c2_23, %c0_24], %263 {strides = array<i32>} : memref<1x4x256xf32, #tpu.memory_space<vmem>>, vector<1x1x256xf32>,
    %cst_25 = arith.constant 0.000000e+00 : f32
    %264 = vector.broadcast %cst_25 : f32 to vector<1x256xf32>
    %265 = arith.maximumf %260, %264 : vector<1x256xf32>
    %c0_26 = arith.constant 0 : index
    %c2_27 = arith.constant 2 : index
    %c0_28 = arith.constant 0 : index
    %266 = vector.load %arg4[%c0_26, %c2_27, %c0_28] : memref<1x4x256xf32, #tpu.memory_space<vmem>>, vector<1x1x256xf32>
    %267 = vector.shape_cast %266 : vector<1x1x256xf32> to vector<1x256xf32>
    %268 = vector.shape_cast %265 : vector<1x256xf32> to vector<1x1x256xf32>
    tpu.vector_store %arg4[%c0_26, %c2_27, %c0_28], %268 {strides = array<i32>} : memref<1x4x256xf32, #tpu.memory_space<vmem>>, vector<1x1x256xf32>,
    %269 = vector.extract_strided_slice %265 {offsets = [0, 0], sizes = [1, 192], strides = [1, 1]} : vector<1x256xf32> to vector<1x192xf32>
    %270 = vector.extract_strided_slice %265 {offsets = [0, 1], sizes = [1, 192], strides = [1, 1]} : vector<1x256xf32> to vector<1x192xf32>
    %271 = arith.maximumf %269, %270 : vector<1x192xf32>
    %272 = vector.extract_strided_slice %265 {offsets = [0, 2], sizes = [1, 192], strides = [1, 1]} : vector<1x256xf32> to vector<1x192xf32>
    %273 = arith.maximumf %271, %272 : vector<1x192xf32>
    %274 = vector.extract_strided_slice %265 {offsets = [0, 3], sizes = [1, 192], strides = [1, 1]} : vector<1x256xf32> to vector<1x192xf32>
    %275 = arith.maximumf %273, %274 : vector<1x192xf32>
    %276 = vector.extract_strided_slice %275 {offsets = [0, 0], sizes = [1, 144], strides = [1, 1]} : vector<1x192xf32> to vector<1x144xf32>
    %277 = vector.extract_strided_slice %275 {offsets = [0, 16], sizes = [1, 144], strides = [1, 1]} : vector<1x192xf32> to vector<1x144xf32>
    %278 = arith.maximumf %276, %277 : vector<1x144xf32>
    %279 = vector.extract_strided_slice %275 {offsets = [0, 32], sizes = [1, 144], strides = [1, 1]} : vector<1x192xf32> to vector<1x144xf32>
    %280 = arith.maximumf %278, %279 : vector<1x144xf32>
    %281 = vector.extract_strided_slice %275 {offsets = [0, 48], sizes = [1, 144], strides = [1, 1]} : vector<1x192xf32> to vector<1x144xf32>
    %282 = arith.maximumf %280, %281 : vector<1x144xf32>
    %283 = vector.extract_strided_slice %265 {offsets = [0, 0], sizes = [1, 112], strides = [1, 1]} : vector<1x256xf32> to vector<1x112xf32>
    %284 = tpu.concatenate %282, %283 in 1 : vector<1x144xf32>, vector<1x112xf32> -> vector<1x256xf32>
    %c0_29 = arith.constant 0 : index
    %c2_30 = arith.constant 2 : index
    %c0_31 = arith.constant 0 : index
    %285 = vector.load %arg5[%c0_29, %c2_30, %c0_31] : memref<1x4x256xf32, #tpu.memory_space<vmem>>, vector<1x1x256xf32>
    %286 = vector.shape_cast %285 : vector<1x1x256xf32> to vector<1x256xf32>
    %287 = vector.shape_cast %284 : vector<1x256xf32> to vector<1x1x256xf32>
    tpu.vector_store %arg5[%c0_29, %c2_30, %c0_31], %287 {strides = array<i32>} : memref<1x4x256xf32, #tpu.memory_space<vmem>>, vector<1x1x256xf32>,
    %c48 = arith.constant 48 : index
    %288 = memref.load %arg1[%c48] : memref<64xf32, #tpu.memory_space<smem>>
    %289 = vector.broadcast %288 : f32 to vector<1x256xf32>
    %290 = arith.mulf %289, %2 : vector<1x256xf32>
    %c49 = arith.constant 49 : index
    %291 = memref.load %arg1[%c49] : memref<64xf32, #tpu.memory_space<smem>>
    %292 = vector.broadcast %291 : f32 to vector<1x256xf32>
    %293 = arith.mulf %292, %3 : vector<1x256xf32>
    %294 = arith.addf %290, %293 : vector<1x256xf32>
    %c50 = arith.constant 50 : index
    %295 = memref.load %arg1[%c50] : memref<64xf32, #tpu.memory_space<smem>>
    %296 = vector.broadcast %295 : f32 to vector<1x256xf32>
    %297 = arith.mulf %296, %4 : vector<1x256xf32>
    %298 = arith.addf %294, %297 : vector<1x256xf32>
    %c51 = arith.constant 51 : index
    %299 = memref.load %arg1[%c51] : memref<64xf32, #tpu.memory_space<smem>>
    %300 = vector.broadcast %299 : f32 to vector<1x256xf32>
    %301 = arith.mulf %300, %5 : vector<1x256xf32>
    %302 = arith.addf %298, %301 : vector<1x256xf32>
    %c52 = arith.constant 52 : index
    %303 = memref.load %arg1[%c52] : memref<64xf32, #tpu.memory_space<smem>>
    %304 = vector.broadcast %303 : f32 to vector<1x256xf32>
    %305 = arith.mulf %304, %6 : vector<1x256xf32>
    %306 = arith.addf %302, %305 : vector<1x256xf32>
    %c53 = arith.constant 53 : index
    %307 = memref.load %arg1[%c53] : memref<64xf32, #tpu.memory_space<smem>>
    %308 = vector.broadcast %307 : f32 to vector<1x256xf32>
    %309 = arith.mulf %308, %7 : vector<1x256xf32>
    %310 = arith.addf %306, %309 : vector<1x256xf32>
    %c54 = arith.constant 54 : index
    %311 = memref.load %arg1[%c54] : memref<64xf32, #tpu.memory_space<smem>>
    %312 = vector.broadcast %311 : f32 to vector<1x256xf32>
    %313 = arith.mulf %312, %8 : vector<1x256xf32>
    %314 = arith.addf %310, %313 : vector<1x256xf32>
    %c55 = arith.constant 55 : index
    %315 = memref.load %arg1[%c55] : memref<64xf32, #tpu.memory_space<smem>>
    %316 = vector.broadcast %315 : f32 to vector<1x256xf32>
    %317 = arith.mulf %316, %9 : vector<1x256xf32>
    %318 = arith.addf %314, %317 : vector<1x256xf32>
    %c56 = arith.constant 56 : index
    %319 = memref.load %arg1[%c56] : memref<64xf32, #tpu.memory_space<smem>>
    %320 = vector.broadcast %319 : f32 to vector<1x256xf32>
    %321 = arith.mulf %320, %10 : vector<1x256xf32>
    %322 = arith.addf %318, %321 : vector<1x256xf32>
    %c57 = arith.constant 57 : index
    %323 = memref.load %arg1[%c57] : memref<64xf32, #tpu.memory_space<smem>>
    %324 = vector.broadcast %323 : f32 to vector<1x256xf32>
    %325 = arith.mulf %324, %11 : vector<1x256xf32>
    %326 = arith.addf %322, %325 : vector<1x256xf32>
    %c58 = arith.constant 58 : index
    %327 = memref.load %arg1[%c58] : memref<64xf32, #tpu.memory_space<smem>>
    %328 = vector.broadcast %327 : f32 to vector<1x256xf32>
    %329 = arith.mulf %328, %12 : vector<1x256xf32>
    %330 = arith.addf %326, %329 : vector<1x256xf32>
    %c59 = arith.constant 59 : index
    %331 = memref.load %arg1[%c59] : memref<64xf32, #tpu.memory_space<smem>>
    %332 = vector.broadcast %331 : f32 to vector<1x256xf32>
    %333 = arith.mulf %332, %13 : vector<1x256xf32>
    %334 = arith.addf %330, %333 : vector<1x256xf32>
    %c60 = arith.constant 60 : index
    %335 = memref.load %arg1[%c60] : memref<64xf32, #tpu.memory_space<smem>>
    %336 = vector.broadcast %335 : f32 to vector<1x256xf32>
    %337 = arith.mulf %336, %14 : vector<1x256xf32>
    %338 = arith.addf %334, %337 : vector<1x256xf32>
    %c61 = arith.constant 61 : index
    %339 = memref.load %arg1[%c61] : memref<64xf32, #tpu.memory_space<smem>>
    %340 = vector.broadcast %339 : f32 to vector<1x256xf32>
    %341 = arith.mulf %340, %15 : vector<1x256xf32>
    %342 = arith.addf %338, %341 : vector<1x256xf32>
    %c62 = arith.constant 62 : index
    %343 = memref.load %arg1[%c62] : memref<64xf32, #tpu.memory_space<smem>>
    %344 = vector.broadcast %343 : f32 to vector<1x256xf32>
    %345 = arith.mulf %344, %16 : vector<1x256xf32>
    %346 = arith.addf %342, %345 : vector<1x256xf32>
    %c63 = arith.constant 63 : index
    %347 = memref.load %arg1[%c63] : memref<64xf32, #tpu.memory_space<smem>>
    %348 = vector.broadcast %347 : f32 to vector<1x256xf32>
    %349 = arith.mulf %348, %17 : vector<1x256xf32>
    %350 = arith.addf %346, %349 : vector<1x256xf32>
    %c0_32 = arith.constant 0 : index
    %c3_33 = arith.constant 3 : index
    %c0_34 = arith.constant 0 : index
    %351 = vector.load %arg3[%c0_32, %c3_33, %c0_34] : memref<1x4x256xf32, #tpu.memory_space<vmem>>, vector<1x1x256xf32>
    %352 = vector.shape_cast %351 : vector<1x1x256xf32> to vector<1x256xf32>
    %353 = vector.shape_cast %350 : vector<1x256xf32> to vector<1x1x256xf32>
    tpu.vector_store %arg3[%c0_32, %c3_33, %c0_34], %353 {strides = array<i32>} : memref<1x4x256xf32, #tpu.memory_space<vmem>>, vector<1x1x256xf32>,
    %cst_35 = arith.constant 0.000000e+00 : f32
    %354 = vector.broadcast %cst_35 : f32 to vector<1x256xf32>
    %355 = arith.maximumf %350, %354 : vector<1x256xf32>
    %c0_36 = arith.constant 0 : index
    %c3_37 = arith.constant 3 : index
    %c0_38 = arith.constant 0 : index
    %356 = vector.load %arg4[%c0_36, %c3_37, %c0_38] : memref<1x4x256xf32, #tpu.memory_space<vmem>>, vector<1x1x256xf32>
    %357 = vector.shape_cast %356 : vector<1x1x256xf32> to vector<1x256xf32>
    %358 = vector.shape_cast %355 : vector<1x256xf32> to vector<1x1x256xf32>
    tpu.vector_store %arg4[%c0_36, %c3_37, %c0_38], %358 {strides = array<i32>} : memref<1x4x256xf32, #tpu.memory_space<vmem>>, vector<1x1x256xf32>,
    %359 = vector.extract_strided_slice %355 {offsets = [0, 0], sizes = [1, 192], strides = [1, 1]} : vector<1x256xf32> to vector<1x192xf32>
    %360 = vector.extract_strided_slice %355 {offsets = [0, 1], sizes = [1, 192], strides = [1, 1]} : vector<1x256xf32> to vector<1x192xf32>
    %361 = arith.maximumf %359, %360 : vector<1x192xf32>
    %362 = vector.extract_strided_slice %355 {offsets = [0, 2], sizes = [1, 192], strides = [1, 1]} : vector<1x256xf32> to vector<1x192xf32>
    %363 = arith.maximumf %361, %362 : vector<1x192xf32>
    %364 = vector.extract_strided_slice %355 {offsets = [0, 3], sizes = [1, 192], strides = [1, 1]} : vector<1x256xf32> to vector<1x192xf32>
    %365 = arith.maximumf %363, %364 : vector<1x192xf32>
    %366 = vector.extract_strided_slice %365 {offsets = [0, 0], sizes = [1, 144], strides = [1, 1]} : vector<1x192xf32> to vector<1x144xf32>
    %367 = vector.extract_strided_slice %365 {offsets = [0, 16], sizes = [1, 144], strides = [1, 1]} : vector<1x192xf32> to vector<1x144xf32>
    %368 = arith.maximumf %366, %367 : vector<1x144xf32>
    %369 = vector.extract_strided_slice %365 {offsets = [0, 32], sizes = [1, 144], strides = [1, 1]} : vector<1x192xf32> to vector<1x144xf32>
    %370 = arith.maximumf %368, %369 : vector<1x144xf32>
    %371 = vector.extract_strided_slice %365 {offsets = [0, 48], sizes = [1, 144], strides = [1, 1]} : vector<1x192xf32> to vector<1x144xf32>
    %372 = arith.maximumf %370, %371 : vector<1x144xf32>
    %373 = vector.extract_strided_slice %355 {offsets = [0, 0], sizes = [1, 112], strides = [1, 1]} : vector<1x256xf32> to vector<1x112xf32>
    %374 = tpu.concatenate %372, %373 in 1 : vector<1x144xf32>, vector<1x112xf32> -> vector<1x256xf32>
    %c0_39 = arith.constant 0 : index
    %c3_40 = arith.constant 3 : index
    %c0_41 = arith.constant 0 : index
    %375 = vector.load %arg5[%c0_39, %c3_40, %c0_41] : memref<1x4x256xf32, #tpu.memory_space<vmem>>, vector<1x1x256xf32>
    %376 = vector.shape_cast %375 : vector<1x1x256xf32> to vector<1x256xf32>
    %377 = vector.shape_cast %374 : vector<1x256xf32> to vector<1x1x256xf32>
    tpu.vector_store %arg5[%c0_39, %c3_40, %c0_41], %377 {strides = array<i32>} : memref<1x4x256xf32, #tpu.memory_space<vmem>>, vector<1x1x256xf32>,
    return
  }
  func.func @transform_0(%arg0: i32) -> i32 {
    %c0_i32 = arith.constant 0 : i32
    %c0_i32_0 = arith.constant 0 : i32
    return %c0_i32 : i32
  }
  func.func @transform_1(%arg0: i32) -> (i32, i32, i32) {
    %c0_i32 = arith.constant 0 : i32
    %c0_i32_0 = arith.constant 0 : i32
    %c0_i32_1 = arith.constant 0 : i32
    return %arg0, %c0_i32, %c0_i32_0 : i32, i32, i32
  }
  func.func @transform_2(%arg0: i32) -> (i32, i32, i32) {
    %c0_i32 = arith.constant 0 : i32
    %c0_i32_0 = arith.constant 0 : i32
    %c0_i32_1 = arith.constant 0 : i32
    return %arg0, %c0_i32, %c0_i32_0 : i32, i32, i32
  }
  func.func @transform_3(%arg0: i32) -> (i32, i32, i32) {
    %c0_i32 = arith.constant 0 : i32
    %c0_i32_0 = arith.constant 0 : i32
    %c0_i32_1 = arith.constant 0 : i32
    return %arg0, %c0_i32, %c0_i32_0 : i32, i32, i32
  }
  func.func @transform_4(%arg0: i32) -> (i32, i32, i32) {
    %c0_i32 = arith.constant 0 : i32
    %c0_i32_0 = arith.constant 0 : i32
    %c0_i32_1 = arith.constant 0 : i32
    return %arg0, %c0_i32, %c0_i32_0 : i32, i32, i32
  }
}

</mosaic_0001>

<llo_original>
// kernel: tpu_custom_call.1
$region0: #{tpu_custom_call.1}
  #allocation0 [shape = 'u32[]', space=smem, size = 0x4, offset = 0x4, fixed_abs, tag = 'smem constant byte address 0x4 - core index']
  #allocation1 [shape = 'u32[144,128]{1,0:T(1,128)}', space=vmem, size = 0x12000, scoped, tag = 'internal scratch']
  %s0 = inlined_call_operand.hbm [shape: f32[64], index: 0, kind: input, shape index: {}]
  %s1 = inlined_call_operand.hbm [shape: f32[2,1,384], index: 1, kind: input, shape index: {}]
  %s2 = inlined_call_operand.hbm [shape: f32[2,4,256], index: 2, kind: output, shape index: {0}]
  %s3 = inlined_call_operand.hbm [shape: f32[2,4,256], index: 3, kind: output, shape index: {1}]
  %s4 = inlined_call_operand.hbm [shape: f32[2,4,256], index: 4, kind: output, shape index: {2}]
  %5 = xla_tuple %s2, %s3, %s4
  %s6 = sld [smem:[#allocation0]]
  $region65: #{tpu_custom_call.1} parent=0
    _
  %s8 = ssub.s32 1, %s6
  %s9 = scalar_select 0, %s8, %s6
  $region1: #{tpu_custom_call.1} parent=0
    #allocation2 [shape = 'u8[512]{0}', space=smem, size = 0x200, scoped, tag = 'input window, operand 0, single buffered']
    #allocation3 [shape = 's32[2]{0}', space=sflag, size = 0x8, scoped, tag = 'scoped memory for tpu_custom_call.1']
    #allocation4 [shape = 's32[2]{0}', space=sflag, size = 0x8, scoped, tag = 'scoped memory for tpu_custom_call.1']
    #allocation5 [shape = 's32[2]{0}', space=sflag, size = 0x8, scoped, tag = 'scoped memory for tpu_custom_call.1']
    #allocation6 [shape = 'u8[3072]{0}', space=vmem, size = 0xc00, scoped, tag = 'input window, operand 1']
    #allocation7 [shape = 'u8[8192]{0}', space=vmem, size = 0x2000, scoped, tag = 'output window, operand 0']
    #allocation8 [shape = 'u8[8192]{0}', space=vmem, size = 0x2000, scoped, tag = 'output window, operand 1']
    #allocation9 [shape = 's32[2]{0}', space=sflag, size = 0x8, scoped, tag = 'scoped memory for tpu_custom_call.1']
    #allocation10 [shape = 'u8[8192]{0}', space=vmem, size = 0x2000, scoped, tag = 'output window, operand 2']
    %10 = vsyncpa [#allocation5], 0
    %11 = vsyncpa [#allocation3], 0
    %s12 = scalar_lea.sflag [#allocation3], 1
    %13 = vsyncpa %s12, 0
    %14 = vsyncpa [#allocation4], 0
    %s15 = scalar_lea.sflag [#allocation4], 1
    %16 = vsyncpa %s15, 0
    %17 = vsyncpa [#allocation9], 0
    %s18 = scalar_lea.sflag [#allocation9], 1
    %19 = vsyncpa %s18, 0
    loop: start=0, step=1, limit=4
    $region2: #{tpu_custom_call.1} parent=1 // loop_pre_header
      _
    $region3: #{tpu_custom_call.1} parent=1 // loop_header
      %s21 = sphi 0, %s25
      %p22 = scmp.ge.s32.totalorder %s21, 4
      %s29 = sphi 0, %s29
      %s31 = sphi 0, %s29
      %s32 = sphi 0, %s31
      %s46 = sphi 0, %s32
      %s52 = sphi 0, %s54
      %s55 = sphi 0, %s52
      %s56 = sphi 0, %s55
      %s72 = sphi 0, %s56
      %s78 = sphi 0, %s80
      %s81 = sphi 0, %s78
      %s82 = sphi 0, %s81
      %s98 = sphi 0, %s82
      %s104 = sphi 0, %s106
      %s107 = sphi 0, %s104
      %s108 = sphi 0, %s107
      %s124 = sphi 0, %s108
      %s130 = sphi 0, %s132
      %s133 = sphi 0, %s130
      %s134 = sphi 0, %s133
      %s150 = sphi 0, %s134
    $region4: #{tpu_custom_call.1} parent=1 // loop_header_branch
      %24 = sbr.rel (%p22) target = $region8
    $region5: #{tpu_custom_call.1} parent=1 // loop_body
      %s26 = ssub.s32 %s21, 1
      %s27 = ssub.s32 %s21, 2
      %s28 = sadd.s32 %s21, 1
      %s30 = sadd.s32 %s29, 1
      %p33 = scmp.eq.s32.totalorder %s21, 1
      %p34 = scmp.ne.s32.totalorder %s29, %s31
      %p35 = scmp.eq.s32.totalorder %s21, 0
      %p36 = por %p34, %p35
      %p37 = scmp.ne.s32.totalorder %s29, %s31
      %p38 = scmp.eq.s32.totalorder %s26, 1
      %p39 = por %p37, %p38
      %p40 = scmp.ne.s32.totalorder %s31, %s32
      %p41 = scmp.eq.s32.totalorder %s26, 0
      %p42 = por %p40, %p41
      %p43 = scmp.ne.s32.totalorder %s31, %s32
      %p44 = scmp.eq.s32.totalorder %s27, 1
      %p45 = por %p43, %p44
      %p47 = scmp.ne.s32.totalorder %s32, %s46
      %p48 = scmp.eq.s32.totalorder %s27, 0
      %p49 = por %p47, %p48
      %s50 = ssub.s32 %s21, %s28
      %p51 = scmp.eq.s32.totalorder %s50, 0
      %s53 = sadd.s32 %s52, 1
      %s54 = scalar_select %p51, %s52, %s53
      %p57 = pneg %p51
      %p58 = scmp.eq.s32.totalorder %s21, 1
      %p59 = por %p57, %p58
      %p60 = scmp.ne.s32.totalorder %s52, %s55
      %p61 = scmp.eq.s32.totalorder %s21, 0
      %p62 = por %p60, %p61
      %p63 = scmp.ne.s32.totalorder %s52, %s55
      %p64 = scmp.eq.s32.totalorder %s26, 1
      %p65 = por %p63, %p64
      %p66 = scmp.ne.s32.totalorder %s55, %s56
      %p67 = scmp.eq.s32.totalorder %s26, 0
      %p68 = por %p66, %p67
      %p69 = scmp.ne.s32.totalorder %s55, %s56
      %p70 = scmp.eq.s32.totalorder %s27, 1
      %p71 = por %p69, %p70
      %p73 = scmp.ne.s32.totalorder %s56, %s72
      %p74 = scmp.eq.s32.totalorder %s27, 0
      %p75 = por %p73, %p74
      %s76 = ssub.s32 %s21, %s28
      %p77 = scmp.eq.s32.totalorder %s76, 0
      %s79 = sadd.s32 %s78, 1
      %s80 = scalar_select %p77, %s78, %s79
      %p83 = pneg %p77
      %p84 = scmp.eq.s32.totalorder %s21, 1
      %p85 = por %p83, %p84
      %p86 = scmp.ne.s32.totalorder %s78, %s81
      %p87 = scmp.eq.s32.totalorder %s21, 0
      %p88 = por %p86, %p87
      %p89 = scmp.ne.s32.totalorder %s78, %s81
      %p90 = scmp.eq.s32.totalorder %s26, 1
      %p91 = por %p89, %p90
      %p92 = scmp.ne.s32.totalorder %s81, %s82
      %p93 = scmp.eq.s32.totalorder %s26, 0
      %p94 = por %p92, %p93
      %p95 = scmp.ne.s32.totalorder %s81, %s82
      %p96 = scmp.eq.s32.totalorder %s27, 1
      %p97 = por %p95, %p96
      %p99 = scmp.ne.s32.totalorder %s82, %s98
      %p100 = scmp.eq.s32.totalorder %s27, 0
      %p101 = por %p99, %p100
      %s102 = ssub.s32 %s21, %s28
      %p103 = scmp.eq.s32.totalorder %s102, 0
      %s105 = sadd.s32 %s104, 1
      %s106 = scalar_select %p103, %s104, %s105
      %p109 = pneg %p103
      %p110 = scmp.eq.s32.totalorder %s21, 1
      %p111 = por %p109, %p110
      %p112 = scmp.ne.s32.totalorder %s104, %s107
      %p113 = scmp.eq.s32.totalorder %s21, 0
      %p114 = por %p112, %p113
      %p115 = scmp.ne.s32.totalorder %s104, %s107
      %p116 = scmp.eq.s32.totalorder %s26, 1
      %p117 = por %p115, %p116
      %p118 = scmp.ne.s32.totalorder %s107, %s108
      %p119 = scmp.eq.s32.totalorder %s26, 0
      %p120 = por %p118, %p119
      %p121 = scmp.ne.s32.totalorder %s107, %s108
      %p122 = scmp.eq.s32.totalorder %s27, 1
      %p123 = por %p121, %p122
      %p125 = scmp.ne.s32.totalorder %s108, %s124
      %p126 = scmp.eq.s32.totalorder %s27, 0
      %p127 = por %p125, %p126
      %s128 = ssub.s32 %s21, %s28
      %p129 = scmp.eq.s32.totalorder %s128, 0
      %s131 = sadd.s32 %s130, 1
      %s132 = scalar_select %p129, %s130, %s131
      %p135 = pneg %p129
      %p136 = scmp.eq.s32.totalorder %s21, 1
      %p137 = por %p135, %p136
      %p138 = scmp.ne.s32.totalorder %s130, %s133
      %p139 = scmp.eq.s32.totalorder %s21, 0
      %p140 = por %p138, %p139
      %p141 = scmp.ne.s32.totalorder %s130, %s133
      %p142 = scmp.eq.s32.totalorder %s26, 1
      %p143 = por %p141, %p142
      %p144 = scmp.ne.s32.totalorder %s133, %s134
      %p145 = scmp.eq.s32.totalorder %s26, 0
      %p146 = por %p144, %p145
      %p147 = scmp.ne.s32.totalorder %s133, %s134
      %p148 = scmp.eq.s32.totalorder %s27, 1
      %p149 = por %p147, %p148
      %p151 = scmp.ne.s32.totalorder %s134, %s150
      %p152 = scmp.eq.s32.totalorder %s27, 0
      %p153 = por %p151, %p152
      %p154 = scmp.le.s32.totalorder 1, %s21
      %p155 = scmp.lt.s32.totalorder %s21, 3
      %p156 = pnand %p154, %p155
      %p157 = pneg %p156
      // Predicated region
      $region9: #{tpu_custom_call.1} parent=5 // pred_check
        _
      $region10: #{tpu_custom_call.1} parent=5 // pred_check_branch
        %159 = sbr.rel (%p156) target = $region12
      $region11: #{tpu_custom_call.1} parent=5 // pred_region
        %s160 = ssub.s32 %s21, 1
        // Predicated region
        $region13: #{tpu_custom_call.1} parent=11 // pred_check
          %p161 = pneg %p42
        $region14: #{tpu_custom_call.1} parent=11 // pred_check_branch
          %163 = sbr.rel (%p161) target = $region16
        $region15: #{tpu_custom_call.1} parent=11 // pred_region
          %s165 = ssub.s32 16, 16
          %166 = vsyncadd [#allocation5], %s165
          %169 = dma.hbm_to_smem %s0, 16, [#allocation2], [#allocation5]
        $region16: #{tpu_custom_call.1} parent=11 // pred_fallthru
          _
      $region12: #{tpu_custom_call.1} parent=5 // pred_fallthru
        _
      %p170 = scmp.lt.s32.totalorder %s21, 2
      // Predicated region
      $region17: #{tpu_custom_call.1} parent=5 // pred_check
        %p171 = pneg %p170
      $region18: #{tpu_custom_call.1} parent=5 // pred_check_branch
        %173 = sbr.rel (%p171) target = $region20
      $region19: #{tpu_custom_call.1} parent=5 // pred_region
        // Predicated region
        $region21: #{tpu_custom_call.1} parent=19 // pred_check
          %p174 = pneg %p62
        $region22: #{tpu_custom_call.1} parent=19 // pred_check_branch
          %176 = sbr.rel (%p174) target = $region24
        $region23: #{tpu_custom_call.1} parent=19 // pred_region
          %s177 = sand.u32 %s52, 1
          %s178 = scalar_lea.sflag [#allocation3], %s177
          %s179 = sand.u32 %s52, 1
          %s180 = smul.addr %s179, 3
          %s181 = scalar_lea.vmem [#allocation6], %s180
          %s183 = ssub.s32 48, 48
          %184 = vsyncadd %s178, %s183
          %s185 = smul.addr %s21, 3
          %s186 = smul.addr %s185, 16
          %s187 = scalar_lea.hbm %s1, %s186
          %s189 = sshll.u32 %s181, 4
          %s190 = int_to_ptr.vmem [resolvable:$true] %s189
          %192 = dma.hbm_to_vmem [thread:$0]  %s187, 48, %s190, %s178
        $region24: #{tpu_custom_call.1} parent=19 // pred_fallthru
          _
      $region20: #{tpu_custom_call.1} parent=5 // pred_fallthru
        _
      %p193 = scmp.le.s32.totalorder 1, %s21
      %p194 = scmp.lt.s32.totalorder %s21, 3
      %p195 = pnand %p193, %p194
      %p196 = pneg %p195
      // Predicated region
      $region25: #{tpu_custom_call.1} parent=5 // pred_check
        _
      $region26: #{tpu_custom_call.1} parent=5 // pred_check_branch
        %198 = sbr.rel (%p195) target = $region28
      $region27: #{tpu_custom_call.1} parent=5 // pred_region
        %s199 = ssub.s32 %s21, 1
        // Predicated region
        $region29: #{tpu_custom_call.1} parent=27 // pred_check
          %p200 = pneg %p42
        $region30: #{tpu_custom_call.1} parent=27 // pred_check_branch
          %202 = sbr.rel (%p200) target = $region32
        $region31: #{tpu_custom_call.1} parent=27 // pred_region
          %203 = dma.done [#allocation5], 16
        $region32: #{tpu_custom_call.1} parent=27 // pred_fallthru
          _
        %s204 = sand.u32 %s55, 1
        %s205 = scalar_lea.sflag [#allocation3], %s204
        %s206 = sand.u32 %s55, 1
        %s207 = smul.addr %s206, 3
        %s208 = scalar_lea.vmem [#allocation6], %s207
        // Predicated region
        $region33: #{tpu_custom_call.1} parent=27 // pred_check
          %p209 = pneg %p68
        $region34: #{tpu_custom_call.1} parent=27 // pred_check_branch
          %211 = sbr.rel (%p209) target = $region36
        $region35: #{tpu_custom_call.1} parent=27 // pred_region
          %212 = dma.done %s205, 48
        $region36: #{tpu_custom_call.1} parent=27 // pred_fallthru
          _
        %213 = sfence
        %p214 = pneg %p42
        %p215 = pneg %p39
        %s216 = sand.u32 %s55, 1
        %s217 = scalar_lea.sflag [#allocation3], %s216
        %s218 = sand.u32 %s55, 1
        %s219 = smul.addr %s218, 3
        %s220 = scalar_lea.vmem [#allocation6], %s219
        %p221 = pneg %p68
        %p222 = pneg %p65
        %p223 = pneg %p94
        %p224 = pneg %p91
        %s225 = sand.u32 %s81, 1
        %s226 = scalar_lea.sflag [#allocation4], %s225
        %s227 = sand.u32 %s81, 1
        %s228 = smul.addr %s227, 8
        %s229 = scalar_lea.vmem [#allocation7], %s228
        %p230 = pneg %p120
        %p231 = pneg %p117
        %s232 = sand.u32 %s26, 1
        %s233 = scalar_lea.sflag [#allocation9], %s232
        %s234 = sand.u32 %s107, 1
        %s235 = smul.addr %s234, 8
        %s236 = scalar_lea.vmem [#allocation8], %s235
        %p237 = pneg %p146
        %p238 = pneg %p143
        %s239 = sand.u32 %s26, 1
        %s240 = scalar_lea.sflag [#allocation9], %s239
        %s241 = sand.u32 %s133, 1
        %s242 = smul.addr %s241, 8
        %s243 = scalar_lea.vmem [#allocation10], %s242
        %v244 = vld [vmem:[%s208] sm:$0x7]
        %s245 = sld [smem:[#allocation2]]
        %v246 = vstv %s245
        %v247 = vmul.f32 %v246, %v244
        %s248 = sld [smem:[#allocation2 + $0x1]]
        %v249 = vstv %s248
        %v250 = vmul.f32 %v249, %v244
        %252 = vrot.lane.b32.xlu0 %v250, 127
        %v253 = vpop.permute.xlu0 %252
        %v254 = vrot.slane %v253, 1
        %vm255 = vcmask 1039360
        %v256 = vsel %vm255, %v253, %v254
        %v258 = vadd.f32 %v247, %v256
        %s259 = sld [smem:[#allocation2 + $0x2]]
        %v260 = vstv %s259
        %v261 = vmul.f32 %v260, %v244
        %263 = vrot.lane.b32.xlu0 %v261, 126
        %v264 = vpop.permute.xlu0 %263
        %v265 = vrot.slane %v264, 1
        %vm266 = vcmask 1031168
        %v267 = vsel %vm266, %v264, %v265
        %v269 = vadd.f32 %v258, %v267
        %s270 = sld [smem:[#allocation2 + $0x3]]
        %v271 = vstv %s270
        %v272 = vmul.f32 %v271, %v244
        %274 = vrot.lane.b32.xlu0 %v272, 125
        %v275 = vpop.permute.xlu0 %274
        %v276 = vrot.slane %v275, 1
        %vm277 = vcmask 1022976
        %v278 = vsel %vm277, %v275, %v276
        %v280 = vadd.f32 %v269, %v278
        %s281 = sld [smem:[#allocation2 + $0x4]]
        %v282 = vstv %s281
        %v283 = vmul.f32 %v282, %v244
        %285 = vrot.lane.b32.xlu0 %v283, 112
        %v286 = vpop.permute.xlu0 %285
        %v287 = vrot.slane %v286, 1
        %vm288 = vcmask 916480
        %v289 = vsel %vm288, %v286, %v287
        %v291 = vadd.f32 %v280, %v289
        %s292 = sld [smem:[#allocation2 + $0x5]]
        %v293 = vstv %s292
        %v294 = vmul.f32 %v293, %v244
        %296 = vrot.lane.b32.xlu0 %v294, 111
        %v297 = vpop.permute.xlu0 %296
        %v298 = vrot.slane %v297, 1
        %vm299 = vcmask 908288
        %v300 = vsel %vm299, %v297, %v298
        %v302 = vadd.f32 %v291, %v300
        %s303 = sld [smem:[#allocation2 + $0x6]]
        %v304 = vstv %s303
        %v305 = vmul.f32 %v304, %v244
        %307 = vrot.lane.b32.xlu0 %v305, 110
        %v308 = vpop.permute.xlu0 %307
        %v309 = vrot.slane %v308, 1
        %vm310 = vcmask 900096
        %v311 = vsel %vm310, %v308, %v309
        %v313 = vadd.f32 %v302, %v311
        %s314 = sld [smem:[#allocation2 + $0x7]]
        %v315 = vstv %s314
        %v316 = vmul.f32 %v315, %v244
        %318 = vrot.lane.b32.xlu0 %v316, 109
        %v319 = vpop.permute.xlu0 %318
        %v320 = vrot.slane %v319, 1
        %vm321 = vcmask 891904
        %v322 = vsel %vm321, %v319, %v320
        %v324 = vadd.f32 %v313, %v322
        %s325 = sld [smem:[#allocation2 + $0x8]]
        %v326 = vstv %s325
        %v327 = vmul.f32 %v326, %v244
        %329 = vrot.lane.b32.xlu0 %v327, 96
        %v330 = vpop.permute.xlu0 %329
        %v331 = vrot.slane %v330, 1
        %vm332 = vcmask 785408
        %v333 = vsel %vm332, %v330, %v331
        %v335 = vadd.f32 %v324, %v333
        %s336 = sld [smem:[#allocation2 + $0x9]]
        %v337 = vstv %s336
        %v338 = vmul.f32 %v337, %v244
        %340 = vrot.lane.b32.xlu0 %v338, 95
        %v341 = vpop.permute.xlu0 %340
        %v342 = vrot.slane %v341, 1
        %vm343 = vcmask 777216
        %v344 = vsel %vm343, %v341, %v342
        %v346 = vadd.f32 %v335, %v344
        %s347 = sld [smem:[#allocation2 + $0xa]]
        %v348 = vstv %s347
        %v349 = vmul.f32 %v348, %v244
        %351 = vrot.lane.b32.xlu0 %v349, 94
        %v352 = vpop.permute.xlu0 %351
        %v353 = vrot.slane %v352, 1
        %vm354 = vcmask 769024
        %v355 = vsel %vm354, %v352, %v353
        %v357 = vadd.f32 %v346, %v355
        %s358 = sld [smem:[#allocation2 + $0xb]]
        %v359 = vstv %s358
        %v360 = vmul.f32 %v359, %v244
        %362 = vrot.lane.b32.xlu0 %v360, 93
        %v363 = vpop.permute.xlu0 %362
        %v364 = vrot.slane %v363, 1
        %vm365 = vcmask 760832
        %v366 = vsel %vm365, %v363, %v364
        %v368 = vadd.f32 %v357, %v366
        %s369 = sld [smem:[#allocation2 + $0xc]]
        %v370 = vstv %s369
        %v371 = vmul.f32 %v370, %v244
        %373 = vrot.lane.b32.xlu0 %v371, 80
        %v374 = vpop.permute.xlu0 %373
        %v375 = vrot.slane %v374, 1
        %vm376 = vcmask 654336
        %v377 = vsel %vm376, %v374, %v375
        %v379 = vadd.f32 %v368, %v377
        %s380 = sld [smem:[#allocation2 + $0xd]]
        %v381 = vstv %s380
        %v382 = vmul.f32 %v381, %v244
        %384 = vrot.lane.b32.xlu0 %v382, 79
        %v385 = vpop.permute.xlu0 %384
        %v386 = vrot.slane %v385, 1
        %vm387 = vcmask 646144
        %v388 = vsel %vm387, %v385, %v386
        %v390 = vadd.f32 %v379, %v388
        %s391 = sld [smem:[#allocation2 + $0xe]]
        %v392 = vstv %s391
        %v393 = vmul.f32 %v392, %v244
        %395 = vrot.lane.b32.xlu0 %v393, 78
        %v396 = vpop.permute.xlu0 %395
        %v397 = vrot.slane %v396, 1
        %vm398 = vcmask 637952
        %v399 = vsel %vm398, %v396, %v397
        %v401 = vadd.f32 %v390, %v399
        %s402 = sld [smem:[#allocation2 + $0xf]]
        %v403 = vstv %s402
        %v404 = vmul.f32 %v403, %v244
        %406 = vrot.lane.b32.xlu0 %v404, 77
        %v407 = vpop.permute.xlu0 %406
        %v408 = vrot.slane %v407, 1
        %vm409 = vcmask 629760
        %v410 = vsel %vm409, %v407, %v408
        %v412 = vadd.f32 %v401, %v410
        %v413 = vlaneseq
        %vm414 = vcmp.ge.s32.totalorder %v413, 0
        %vm415 = vcmp.lt.s32.totalorder %v413, 256
        %vm416 = vmand %vm414, %vm415
        %417 = vst.msk [vmem:[%s229] ss:$4 sm:$0x3] %vm416, %v412
        %v418 = vmax.f32 %v412, 0.0
        %419 = vst.msk [vmem:[%s236] ss:$4 sm:$0x3] %vm416, %v418
        %421 = vrot.lane.b32.xlu0 %v418, 127
        %v422 = vpop.permute.xlu0 %421
        %v423 = vrot.slane %v422, 1
        %v424 = vsel %vm255, %v422, %v423
        %v426 = vmax.f32 %v418, %v424
        %427 = vrot.lane.b32.xlu0 %v418, 126
        %v428 = vpop.permute.xlu0 %427
        %v429 = vrot.slane %v428, 1
        %v430 = vsel %vm266, %v428, %v429
        %v432 = vmax.f32 %v426, %v430
        %433 = vrot.lane.b32.xlu0 %v418, 125
        %v434 = vpop.permute.xlu0 %433
        %v435 = vrot.slane %v434, 1
        %v436 = vsel %vm277, %v434, %v435
        %v438 = vmax.f32 %v432, %v436
        %440 = vrot.lane.b32.xlu0 %v438, 112
        %v441 = vpop.permute.xlu0 %440
        %v442 = vrot.slane %v441, 1
        %v443 = vsel %vm288, %v441, %v442
        %v445 = vmax.f32 %v438, %v443
        %446 = vrot.lane.b32.xlu0 %v438, 96
        %v447 = vpop.permute.xlu0 %446
        %v448 = vrot.slane %v447, 1
        %v449 = vsel %vm332, %v447, %v448
        %v451 = vmax.f32 %v445, %v449
        %452 = vrot.lane.b32.xlu0 %v438, 80
        %v453 = vpop.permute.xlu0 %452
        %v454 = vrot.slane %v453, 1
        %v455 = vsel %vm376, %v453, %v454
        %v457 = vmax.f32 %v451, %v455
        %v459 = vlaneseq
        %v460 = vshrl.u32 %v459, 7
        %v461 = vsub.s32 0, %v460
        %v462 = vrot.slane %v457, %v461
        %v463 = vlaneseq
        %v464 = vshrl.u32 %v463, 7
        %v465 = vsub.s32 1, %v464
        %v466 = vrot.slane %v457, %v465
        %v468 = vlaneseq
        %v469 = vshrl.u32 %v468, 7
        %v470 = vsub.s32 0, %v469
        %v471 = vrot.slane %v418, %v470
        %472 = vrot.lane.b32.xlu0 %v471, 16
        %v473 = vpop.permute.xlu0 %472
        %vm475 = vcmask 130048
        %v476 = vsel %vm475, %v466, %v473
        %v478 = vcombine.low %v462, %v476
        %v480 = vunpack.c.l.s4 1966171168
        %v481 = vunpack.c.0.s8 %v480
        %v482 = vlaneseq
        %v483 = vshrl.u32 %v482, 7
        %v484 = vsub.s32 %v481, %v483
        %v485 = vrot.slane %v478, %v484
        %v487 = vunpack.c.l.s4 1966171168
        %v488 = vunpack.c.0.s8 %v487
        %v489 = vlaneseq
        %v490 = vshrl.u32 %v489, 7
        %v491 = vsub.s32 %v488, %v490
        %v492 = vrot.slane %v485, %v491
        %494 = vst.msk [vmem:[%s243] ss:$4 sm:$0x3] %vm416, %v492
        %s495 = sld [smem:[#allocation2 + $0x10]]
        %v496 = vstv %s495
        %v497 = vmul.f32 %v496, %v244
        %s498 = sld [smem:[#allocation2 + $0x11]]
        %v499 = vstv %s498
        %v500 = vmul.f32 %v499, %v244
        %502 = vrot.lane.b32.xlu0 %v500, 127
        %v503 = vpop.permute.xlu0 %502
        %v504 = vrot.slane %v503, 1
        %v505 = vsel %vm255, %v503, %v504
        %v507 = vadd.f32 %v497, %v505
        %s508 = sld [smem:[#allocation2 + $0x12]]
        %v509 = vstv %s508
        %v510 = vmul.f32 %v509, %v244
        %512 = vrot.lane.b32.xlu0 %v510, 126
        %v513 = vpop.permute.xlu0 %512
        %v514 = vrot.slane %v513, 1
        %v515 = vsel %vm266, %v513, %v514
        %v517 = vadd.f32 %v507, %v515
        %s518 = sld [smem:[#allocation2 + $0x13]]
        %v519 = vstv %s518
        %v520 = vmul.f32 %v519, %v244
        %522 = vrot.lane.b32.xlu0 %v520, 125
        %v523 = vpop.permute.xlu0 %522
        %v524 = vrot.slane %v523, 1
        %v525 = vsel %vm277, %v523, %v524
        %v527 = vadd.f32 %v517, %v525
        %s528 = sld [smem:[#allocation2 + $0x14]]
        %v529 = vstv %s528
        %v530 = vmul.f32 %v529, %v244
        %532 = vrot.lane.b32.xlu0 %v530, 112
        %v533 = vpop.permute.xlu0 %532
        %v534 = vrot.slane %v533, 1
        %v535 = vsel %vm288, %v533, %v534
        %v537 = vadd.f32 %v527, %v535
        %s538 = sld [smem:[#allocation2 + $0x15]]
        %v539 = vstv %s538
        %v540 = vmul.f32 %v539, %v244
        %542 = vrot.lane.b32.xlu0 %v540, 111
        %v543 = vpop.permute.xlu0 %542
        %v544 = vrot.slane %v543, 1
        %v545 = vsel %vm299, %v543, %v544
        %v547 = vadd.f32 %v537, %v545
        %s548 = sld [smem:[#allocation2 + $0x16]]
        %v549 = vstv %s548
        %v550 = vmul.f32 %v549, %v244
        %552 = vrot.lane.b32.xlu0 %v550, 110
        %v553 = vpop.permute.xlu0 %552
        %v554 = vrot.slane %v553, 1
        %v555 = vsel %vm310, %v553, %v554
        %v557 = vadd.f32 %v547, %v555
        %s558 = sld [smem:[#allocation2 + $0x17]]
        %v559 = vstv %s558
        %v560 = vmul.f32 %v559, %v244
        %562 = vrot.lane.b32.xlu0 %v560, 109
        %v563 = vpop.permute.xlu0 %562
        %v564 = vrot.slane %v563, 1
        %v565 = vsel %vm321, %v563, %v564
        %v567 = vadd.f32 %v557, %v565
        %s568 = sld [smem:[#allocation2 + $0x18]]
        %v569 = vstv %s568
        %v570 = vmul.f32 %v569, %v244
        %572 = vrot.lane.b32.xlu0 %v570, 96
        %v573 = vpop.permute.xlu0 %572
        %v574 = vrot.slane %v573, 1
        %v575 = vsel %vm332, %v573, %v574
        %v577 = vadd.f32 %v567, %v575
        %s578 = sld [smem:[#allocation2 + $0x19]]
        %v579 = vstv %s578
        %v580 = vmul.f32 %v579, %v244
        %582 = vrot.lane.b32.xlu0 %v580, 95
        %v583 = vpop.permute.xlu0 %582
        %v584 = vrot.slane %v583, 1
        %v585 = vsel %vm343, %v583, %v584
        %v587 = vadd.f32 %v577, %v585
        %s588 = sld [smem:[#allocation2 + $0x1a]]
        %v589 = vstv %s588
        %v590 = vmul.f32 %v589, %v244
        %592 = vrot.lane.b32.xlu0 %v590, 94
        %v593 = vpop.permute.xlu0 %592
        %v594 = vrot.slane %v593, 1
        %v595 = vsel %vm354, %v593, %v594
        %v597 = vadd.f32 %v587, %v595
        %s598 = sld [smem:[#allocation2 + $0x1b]]
        %v599 = vstv %s598
        %v600 = vmul.f32 %v599, %v244
        %602 = vrot.lane.b32.xlu0 %v600, 93
        %v603 = vpop.permute.xlu0 %602
        %v604 = vrot.slane %v603, 1
        %v605 = vsel %vm365, %v603, %v604
        %v607 = vadd.f32 %v597, %v605
        %s608 = sld [smem:[#allocation2 + $0x1c]]
        %v609 = vstv %s608
        %v610 = vmul.f32 %v609, %v244
        %612 = vrot.lane.b32.xlu0 %v610, 80
        %v613 = vpop.permute.xlu0 %612
        %v614 = vrot.slane %v613, 1
        %v615 = vsel %vm376, %v613, %v614
        %v617 = vadd.f32 %v607, %v615
        %s618 = sld [smem:[#allocation2 + $0x1d]]
        %v619 = vstv %s618
        %v620 = vmul.f32 %v619, %v244
        %622 = vrot.lane.b32.xlu0 %v620, 79
        %v623 = vpop.permute.xlu0 %622
        %v624 = vrot.slane %v623, 1
        %v625 = vsel %vm387, %v623, %v624
        %v627 = vadd.f32 %v617, %v625
        %s628 = sld [smem:[#allocation2 + $0x1e]]
        %v629 = vstv %s628
        %v630 = vmul.f32 %v629, %v244
        %632 = vrot.lane.b32.xlu0 %v630, 78
        %v633 = vpop.permute.xlu0 %632
        %v634 = vrot.slane %v633, 1
        %v635 = vsel %vm398, %v633, %v634
        %v637 = vadd.f32 %v627, %v635
        %s638 = sld [smem:[#allocation2 + $0x1f]]
        %v639 = vstv %s638
        %v640 = vmul.f32 %v639, %v244
        %642 = vrot.lane.b32.xlu0 %v640, 77
        %v643 = vpop.permute.xlu0 %642
        %v644 = vrot.slane %v643, 1
        %v645 = vsel %vm409, %v643, %v644
        %v647 = vadd.f32 %v637, %v645
        %s648 = scalar_lea.vmem %s229, 1 [#allocation7]
        %649 = vst.msk [vmem:[%s648] ss:$4 sm:$0x3] %vm416, %v647
        %v650 = vmax.f32 %v647, 0.0
        %s651 = scalar_lea.vmem %s236, 1 [#allocation8]
        %652 = vst.msk [vmem:[%s651] ss:$4 sm:$0x3] %vm416, %v650
        %654 = vrot.lane.b32.xlu0 %v650, 127
        %v655 = vpop.permute.xlu0 %654
        %v656 = vrot.slane %v655, 1
        %v657 = vsel %vm255, %v655, %v656
        %v659 = vmax.f32 %v650, %v657
        %660 = vrot.lane.b32.xlu0 %v650, 126
        %v661 = vpop.permute.xlu0 %660
        %v662 = vrot.slane %v661, 1
        %v663 = vsel %vm266, %v661, %v662
        %v665 = vmax.f32 %v659, %v663
        %666 = vrot.lane.b32.xlu0 %v650, 125
        %v667 = vpop.permute.xlu0 %666
        %v668 = vrot.slane %v667, 1
        %v669 = vsel %vm277, %v667, %v668
        %v671 = vmax.f32 %v665, %v669
        %673 = vrot.lane.b32.xlu0 %v671, 112
        %v674 = vpop.permute.xlu0 %673
        %v675 = vrot.slane %v674, 1
        %v676 = vsel %vm288, %v674, %v675
        %v678 = vmax.f32 %v671, %v676
        %679 = vrot.lane.b32.xlu0 %v671, 96
        %v680 = vpop.permute.xlu0 %679
        %v681 = vrot.slane %v680, 1
        %v682 = vsel %vm332, %v680, %v681
        %v684 = vmax.f32 %v678, %v682
        %685 = vrot.lane.b32.xlu0 %v671, 80
        %v686 = vpop.permute.xlu0 %685
        %v687 = vrot.slane %v686, 1
        %v688 = vsel %vm376, %v686, %v687
        %v690 = vmax.f32 %v684, %v688
        %v692 = vlaneseq
        %v693 = vshrl.u32 %v692, 7
        %v694 = vsub.s32 0, %v693
        %v695 = vrot.slane %v690, %v694
        %v696 = vlaneseq
        %v697 = vshrl.u32 %v696, 7
        %v698 = vsub.s32 1, %v697
        %v699 = vrot.slane %v690, %v698
        %v701 = vlaneseq
        %v702 = vshrl.u32 %v701, 7
        %v703 = vsub.s32 0, %v702
        %v704 = vrot.slane %v650, %v703
        %705 = vrot.lane.b32.xlu0 %v704, 16
        %v706 = vpop.permute.xlu0 %705
        %v708 = vsel %vm475, %v699, %v706
        %v710 = vcombine.low %v695, %v708
        %v712 = vunpack.c.l.s4 1966171168
        %v713 = vunpack.c.0.s8 %v712
        %v714 = vlaneseq
        %v715 = vshrl.u32 %v714, 7
        %v716 = vsub.s32 %v713, %v715
        %v717 = vrot.slane %v710, %v716
        %v719 = vunpack.c.l.s4 1966171168
        %v720 = vunpack.c.0.s8 %v719
        %v721 = vlaneseq
        %v722 = vshrl.u32 %v721, 7
        %v723 = vsub.s32 %v720, %v722
        %v724 = vrot.slane %v717, %v723
        %s726 = scalar_lea.vmem %s243, 1 [#allocation10]
        %727 = vst.msk [vmem:[%s726] ss:$4 sm:$0x3] %vm416, %v724
        %s728 = sld [smem:[#allocation2 + $0x20]]
        %v729 = vstv %s728
        %v730 = vmul.f32 %v729, %v244
        %s731 = sld [smem:[#allocation2 + $0x21]]
        %v732 = vstv %s731
        %v733 = vmul.f32 %v732, %v244
        %735 = vrot.lane.b32.xlu0 %v733, 127
        %v736 = vpop.permute.xlu0 %735
        %v737 = vrot.slane %v736, 1
        %v738 = vsel %vm255, %v736, %v737
        %v740 = vadd.f32 %v730, %v738
        %s741 = sld [smem:[#allocation2 + $0x22]]
        %v742 = vstv %s741
        %v743 = vmul.f32 %v742, %v244
        %745 = vrot.lane.b32.xlu0 %v743, 126
        %v746 = vpop.permute.xlu0 %745
        %v747 = vrot.slane %v746, 1
        %v748 = vsel %vm266, %v746, %v747
        %v750 = vadd.f32 %v740, %v748
        %s751 = sld [smem:[#allocation2 + $0x23]]
        %v752 = vstv %s751
        %v753 = vmul.f32 %v752, %v244
        %755 = vrot.lane.b32.xlu0 %v753, 125
        %v756 = vpop.permute.xlu0 %755
        %v757 = vrot.slane %v756, 1
        %v758 = vsel %vm277, %v756, %v757
        %v760 = vadd.f32 %v750, %v758
        %s761 = sld [smem:[#allocation2 + $0x24]]
        %v762 = vstv %s761
        %v763 = vmul.f32 %v762, %v244
        %765 = vrot.lane.b32.xlu0 %v763, 112
        %v766 = vpop.permute.xlu0 %765
        %v767 = vrot.slane %v766, 1
        %v768 = vsel %vm288, %v766, %v767
        %v770 = vadd.f32 %v760, %v768
        %s771 = sld [smem:[#allocation2 + $0x25]]
        %v772 = vstv %s771
        %v773 = vmul.f32 %v772, %v244
        %775 = vrot.lane.b32.xlu0 %v773, 111
        %v776 = vpop.permute.xlu0 %775
        %v777 = vrot.slane %v776, 1
        %v778 = vsel %vm299, %v776, %v777
        %v780 = vadd.f32 %v770, %v778
        %s781 = sld [smem:[#allocation2 + $0x26]]
        %v782 = vstv %s781
        %v783 = vmul.f32 %v782, %v244
        %785 = vrot.lane.b32.xlu0 %v783, 110
        %v786 = vpop.permute.xlu0 %785
        %v787 = vrot.slane %v786, 1
        %v788 = vsel %vm310, %v786, %v787
        %v790 = vadd.f32 %v780, %v788
        %s791 = sld [smem:[#allocation2 + $0x27]]
        %v792 = vstv %s791
        %v793 = vmul.f32 %v792, %v244
        %795 = vrot.lane.b32.xlu0 %v793, 109
        %v796 = vpop.permute.xlu0 %795
        %v797 = vrot.slane %v796, 1
        %v798 = vsel %vm321, %v796, %v797
        %v800 = vadd.f32 %v790, %v798
        %s801 = sld [smem:[#allocation2 + $0x28]]
        %v802 = vstv %s801
        %v803 = vmul.f32 %v802, %v244
        %805 = vrot.lane.b32.xlu0 %v803, 96
        %v806 = vpop.permute.xlu0 %805
        %v807 = vrot.slane %v806, 1
        %v808 = vsel %vm332, %v806, %v807
        %v810 = vadd.f32 %v800, %v808
        %s811 = sld [smem:[#allocation2 + $0x29]]
        %v812 = vstv %s811
        %v813 = vmul.f32 %v812, %v244
        %815 = vrot.lane.b32.xlu0 %v813, 95
        %v816 = vpop.permute.xlu0 %815
        %v817 = vrot.slane %v816, 1
        %v818 = vsel %vm343, %v816, %v817
        %v820 = vadd.f32 %v810, %v818
        %s821 = sld [smem:[#allocation2 + $0x2a]]
        %v822 = vstv %s821
        %v823 = vmul.f32 %v822, %v244
        %825 = vrot.lane.b32.xlu0 %v823, 94
        %v826 = vpop.permute.xlu0 %825
        %v827 = vrot.slane %v826, 1
        %v828 = vsel %vm354, %v826, %v827
        %v830 = vadd.f32 %v820, %v828
        %s831 = sld [smem:[#allocation2 + $0x2b]]
        %v832 = vstv %s831
        %v833 = vmul.f32 %v832, %v244
        %835 = vrot.lane.b32.xlu0 %v833, 93
        %v836 = vpop.permute.xlu0 %835
        %v837 = vrot.slane %v836, 1
        %v838 = vsel %vm365, %v836, %v837
        %v840 = vadd.f32 %v830, %v838
        %s841 = sld [smem:[#allocation2 + $0x2c]]
        %v842 = vstv %s841
        %v843 = vmul.f32 %v842, %v244
        %845 = vrot.lane.b32.xlu0 %v843, 80
        %v846 = vpop.permute.xlu0 %845
        %v847 = vrot.slane %v846, 1
        %v848 = vsel %vm376, %v846, %v847
        %v850 = vadd.f32 %v840, %v848
        %s851 = sld [smem:[#allocation2 + $0x2d]]
        %v852 = vstv %s851
        %v853 = vmul.f32 %v852, %v244
        %855 = vrot.lane.b32.xlu0 %v853, 79
        %v856 = vpop.permute.xlu0 %855
        %v857 = vrot.slane %v856, 1
        %v858 = vsel %vm387, %v856, %v857
        %v860 = vadd.f32 %v850, %v858
        %s861 = sld [smem:[#allocation2 + $0x2e]]
        %v862 = vstv %s861
        %v863 = vmul.f32 %v862, %v244
        %865 = vrot.lane.b32.xlu0 %v863, 78
        %v866 = vpop.permute.xlu0 %865
        %v867 = vrot.slane %v866, 1
        %v868 = vsel %vm398, %v866, %v867
        %v870 = vadd.f32 %v860, %v868
        %s871 = sld [smem:[#allocation2 + $0x2f]]
        %v872 = vstv %s871
        %v873 = vmul.f32 %v872, %v244
        %875 = vrot.lane.b32.xlu0 %v873, 77
        %v876 = vpop.permute.xlu0 %875
        %v877 = vrot.slane %v876, 1
        %v878 = vsel %vm409, %v876, %v877
        %v880 = vadd.f32 %v870, %v878
        %s881 = scalar_lea.vmem %s229, 2 [#allocation7]
        %882 = vst.msk [vmem:[%s881] ss:$4 sm:$0x3] %vm416, %v880
        %v883 = vmax.f32 %v880, 0.0
        %s884 = scalar_lea.vmem %s236, 2 [#allocation8]
        %885 = vst.msk [vmem:[%s884] ss:$4 sm:$0x3] %vm416, %v883
        %887 = vrot.lane.b32.xlu0 %v883, 127
        %v888 = vpop.permute.xlu0 %887
        %v889 = vrot.slane %v888, 1
        %v890 = vsel %vm255, %v888, %v889
        %v892 = vmax.f32 %v883, %v890
        %893 = vrot.lane.b32.xlu0 %v883, 126
        %v894 = vpop.permute.xlu0 %893
        %v895 = vrot.slane %v894, 1
        %v896 = vsel %vm266, %v894, %v895
        %v898 = vmax.f32 %v892, %v896
        %899 = vrot.lane.b32.xlu0 %v883, 125
        %v900 = vpop.permute.xlu0 %899
        %v901 = vrot.slane %v900, 1
        %v902 = vsel %vm277, %v900, %v901
        %v904 = vmax.f32 %v898, %v902
        %906 = vrot.lane.b32.xlu0 %v904, 112
        %v907 = vpop.permute.xlu0 %906
        %v908 = vrot.slane %v907, 1
        %v909 = vsel %vm288, %v907, %v908
        %v911 = vmax.f32 %v904, %v909
        %912 = vrot.lane.b32.xlu0 %v904, 96
        %v913 = vpop.permute.xlu0 %912
        %v914 = vrot.slane %v913, 1
        %v915 = vsel %vm332, %v913, %v914
        %v917 = vmax.f32 %v911, %v915
        %918 = vrot.lane.b32.xlu0 %v904, 80
        %v919 = vpop.permute.xlu0 %918
        %v920 = vrot.slane %v919, 1
        %v921 = vsel %vm376, %v919, %v920
        %v923 = vmax.f32 %v917, %v921
        %v925 = vlaneseq
        %v926 = vshrl.u32 %v925, 7
        %v927 = vsub.s32 0, %v926
        %v928 = vrot.slane %v923, %v927
        %v929 = vlaneseq
        %v930 = vshrl.u32 %v929, 7
        %v931 = vsub.s32 1, %v930
        %v932 = vrot.slane %v923, %v931
        %v934 = vlaneseq
        %v935 = vshrl.u32 %v934, 7
        %v936 = vsub.s32 0, %v935
        %v937 = vrot.slane %v883, %v936
        %938 = vrot.lane.b32.xlu0 %v937, 16
        %v939 = vpop.permute.xlu0 %938
        %v941 = vsel %vm475, %v932, %v939
        %v943 = vcombine.low %v928, %v941
        %v945 = vunpack.c.l.s4 1966171168
        %v946 = vunpack.c.0.s8 %v945
        %v947 = vlaneseq
        %v948 = vshrl.u32 %v947, 7
        %v949 = vsub.s32 %v946, %v948
        %v950 = vrot.slane %v943, %v949
        %v952 = vunpack.c.l.s4 1966171168
        %v953 = vunpack.c.0.s8 %v952
        %v954 = vlaneseq
        %v955 = vshrl.u32 %v954, 7
        %v956 = vsub.s32 %v953, %v955
        %v957 = vrot.slane %v950, %v956
        %s959 = scalar_lea.vmem %s243, 2 [#allocation10]
        %960 = vst.msk [vmem:[%s959] ss:$4 sm:$0x3] %vm416, %v957
        %s961 = sld [smem:[#allocation2 + $0x30]]
        %v962 = vstv %s961
        %v963 = vmul.f32 %v962, %v244
        %s964 = sld [smem:[#allocation2 + $0x31]]
        %v965 = vstv %s964
        %v966 = vmul.f32 %v965, %v244
        %968 = vrot.lane.b32.xlu0 %v966, 127
        %v969 = vpop.permute.xlu0 %968
        %v970 = vrot.slane %v969, 1
        %v971 = vsel %vm255, %v969, %v970
        %v973 = vadd.f32 %v963, %v971
        %s974 = sld [smem:[#allocation2 + $0x32]]
        %v975 = vstv %s974
        %v976 = vmul.f32 %v975, %v244
        %978 = vrot.lane.b32.xlu0 %v976, 126
        %v979 = vpop.permute.xlu0 %978
        %v980 = vrot.slane %v979, 1
        %v981 = vsel %vm266, %v979, %v980
        %v983 = vadd.f32 %v973, %v981
        %s984 = sld [smem:[#allocation2 + $0x33]]
        %v985 = vstv %s984
        %v986 = vmul.f32 %v985, %v244
        %988 = vrot.lane.b32.xlu0 %v986, 125
        %v989 = vpop.permute.xlu0 %988
        %v990 = vrot.slane %v989, 1
        %v991 = vsel %vm277, %v989, %v990
        %v993 = vadd.f32 %v983, %v991
        %s994 = sld [smem:[#allocation2 + $0x34]]
        %v995 = vstv %s994
        %v996 = vmul.f32 %v995, %v244
        %998 = vrot.lane.b32.xlu0 %v996, 112
        %v999 = vpop.permute.xlu0 %998
        %v1000 = vrot.slane %v999, 1
        %v1001 = vsel %vm288, %v999, %v1000
        %v1003 = vadd.f32 %v993, %v1001
        %s1004 = sld [smem:[#allocation2 + $0x35]]
        %v1005 = vstv %s1004
        %v1006 = vmul.f32 %v1005, %v244
        %1008 = vrot.lane.b32.xlu0 %v1006, 111
        %v1009 = vpop.permute.xlu0 %1008
        %v1010 = vrot.slane %v1009, 1
        %v1011 = vsel %vm299, %v1009, %v1010
        %v1013 = vadd.f32 %v1003, %v1011
        %s1014 = sld [smem:[#allocation2 + $0x36]]
        %v1015 = vstv %s1014
        %v1016 = vmul.f32 %v1015, %v244
        %1018 = vrot.lane.b32.xlu0 %v1016, 110
        %v1019 = vpop.permute.xlu0 %1018
        %v1020 = vrot.slane %v1019, 1
        %v1021 = vsel %vm310, %v1019, %v1020
        %v1023 = vadd.f32 %v1013, %v1021
        %s1024 = sld [smem:[#allocation2 + $0x37]]
        %v1025 = vstv %s1024
        %v1026 = vmul.f32 %v1025, %v244
        %1028 = vrot.lane.b32.xlu0 %v1026, 109
        %v1029 = vpop.permute.xlu0 %1028
        %v1030 = vrot.slane %v1029, 1
        %v1031 = vsel %vm321, %v1029, %v1030
        %v1033 = vadd.f32 %v1023, %v1031
        %s1034 = sld [smem:[#allocation2 + $0x38]]
        %v1035 = vstv %s1034
        %v1036 = vmul.f32 %v1035, %v244
        %1038 = vrot.lane.b32.xlu0 %v1036, 96
        %v1039 = vpop.permute.xlu0 %1038
        %v1040 = vrot.slane %v1039, 1
        %v1041 = vsel %vm332, %v1039, %v1040
        %v1043 = vadd.f32 %v1033, %v1041
        %s1044 = sld [smem:[#allocation2 + $0x39]]
        %v1045 = vstv %s1044
        %v1046 = vmul.f32 %v1045, %v244
        %1048 = vrot.lane.b32.xlu0 %v1046, 95
        %v1049 = vpop.permute.xlu0 %1048
        %v1050 = vrot.slane %v1049, 1
        %v1051 = vsel %vm343, %v1049, %v1050
        %v1053 = vadd.f32 %v1043, %v1051
        %s1054 = sld [smem:[#allocation2 + $0x3a]]
        %v1055 = vstv %s1054
        %v1056 = vmul.f32 %v1055, %v244
        %1058 = vrot.lane.b32.xlu0 %v1056, 94
        %v1059 = vpop.permute.xlu0 %1058
        %v1060 = vrot.slane %v1059, 1
        %v1061 = vsel %vm354, %v1059, %v1060
        %v1063 = vadd.f32 %v1053, %v1061
        %s1064 = sld [smem:[#allocation2 + $0x3b]]
        %v1065 = vstv %s1064
        %v1066 = vmul.f32 %v1065, %v244
        %1068 = vrot.lane.b32.xlu0 %v1066, 93
        %v1069 = vpop.permute.xlu0 %1068
        %v1070 = vrot.slane %v1069, 1
        %v1071 = vsel %vm365, %v1069, %v1070
        %v1073 = vadd.f32 %v1063, %v1071
        %s1074 = sld [smem:[#allocation2 + $0x3c]]
        %v1075 = vstv %s1074
        %v1076 = vmul.f32 %v1075, %v244
        %1078 = vrot.lane.b32.xlu0 %v1076, 80
        %v1079 = vpop.permute.xlu0 %1078
        %v1080 = vrot.slane %v1079, 1
        %v1081 = vsel %vm376, %v1079, %v1080
        %v1083 = vadd.f32 %v1073, %v1081
        %s1084 = sld [smem:[#allocation2 + $0x3d]]
        %v1085 = vstv %s1084
        %v1086 = vmul.f32 %v1085, %v244
        %1088 = vrot.lane.b32.xlu0 %v1086, 79
        %v1089 = vpop.permute.xlu0 %1088
        %v1090 = vrot.slane %v1089, 1
        %v1091 = vsel %vm387, %v1089, %v1090
        %v1093 = vadd.f32 %v1083, %v1091
        %s1094 = sld [smem:[#allocation2 + $0x3e]]
        %v1095 = vstv %s1094
        %v1096 = vmul.f32 %v1095, %v244
        %1098 = vrot.lane.b32.xlu0 %v1096, 78
        %v1099 = vpop.permute.xlu0 %1098
        %v1100 = vrot.slane %v1099, 1
        %v1101 = vsel %vm398, %v1099, %v1100
        %v1103 = vadd.f32 %v1093, %v1101
        %s1104 = sld [smem:[#allocation2 + $0x3f]]
        %v1105 = vstv %s1104
        %v1106 = vmul.f32 %v1105, %v244
        %1108 = vrot.lane.b32.xlu0 %v1106, 77
        %v1109 = vpop.permute.xlu0 %1108
        %v1110 = vrot.slane %v1109, 1
        %v1111 = vsel %vm409, %v1109, %v1110
        %v1113 = vadd.f32 %v1103, %v1111
        %s1114 = scalar_lea.vmem %s229, 3 [#allocation7]
        %1115 = vst.msk [vmem:[%s1114] ss:$4 sm:$0x3] %vm416, %v1113
        %v1116 = vmax.f32 %v1113, 0.0
        %s1117 = scalar_lea.vmem %s236, 3 [#allocation8]
        %1118 = vst.msk [vmem:[%s1117] ss:$4 sm:$0x3] %vm416, %v1116
        %1120 = vrot.lane.b32.xlu0 %v1116, 127
        %v1121 = vpop.permute.xlu0 %1120
        %v1122 = vrot.slane %v1121, 1
        %v1123 = vsel %vm255, %v1121, %v1122
        %v1125 = vmax.f32 %v1116, %v1123
        %1126 = vrot.lane.b32.xlu0 %v1116, 126
        %v1127 = vpop.permute.xlu0 %1126
        %v1128 = vrot.slane %v1127, 1
        %v1129 = vsel %vm266, %v1127, %v1128
        %v1131 = vmax.f32 %v1125, %v1129
        %1132 = vrot.lane.b32.xlu0 %v1116, 125
        %v1133 = vpop.permute.xlu0 %1132
        %v1134 = vrot.slane %v1133, 1
        %v1135 = vsel %vm277, %v1133, %v1134
        %v1137 = vmax.f32 %v1131, %v1135
        %1139 = vrot.lane.b32.xlu0 %v1137, 112
        %v1140 = vpop.permute.xlu0 %1139
        %v1141 = vrot.slane %v1140, 1
        %v1142 = vsel %vm288, %v1140, %v1141
        %v1144 = vmax.f32 %v1137, %v1142
        %1145 = vrot.lane.b32.xlu0 %v1137, 96
        %v1146 = vpop.permute.xlu0 %1145
        %v1147 = vrot.slane %v1146, 1
        %v1148 = vsel %vm332, %v1146, %v1147
        %v1150 = vmax.f32 %v1144, %v1148
        %1151 = vrot.lane.b32.xlu0 %v1137, 80
        %v1152 = vpop.permute.xlu0 %1151
        %v1153 = vrot.slane %v1152, 1
        %v1154 = vsel %vm376, %v1152, %v1153
        %v1156 = vmax.f32 %v1150, %v1154
        %v1158 = vlaneseq
        %v1159 = vshrl.u32 %v1158, 7
        %v1160 = vsub.s32 0, %v1159
        %v1161 = vrot.slane %v1156, %v1160
        %v1162 = vlaneseq
        %v1163 = vshrl.u32 %v1162, 7
        %v1164 = vsub.s32 1, %v1163
        %v1165 = vrot.slane %v1156, %v1164
        %v1167 = vlaneseq
        %v1168 = vshrl.u32 %v1167, 7
        %v1169 = vsub.s32 0, %v1168
        %v1170 = vrot.slane %v1116, %v1169
        %1171 = vrot.lane.b32.xlu0 %v1170, 16
        %v1172 = vpop.permute.xlu0 %1171
        %v1174 = vsel %vm475, %v1165, %v1172
        %v1176 = vcombine.low %v1161, %v1174
        %v1178 = vunpack.c.l.s4 1966171168
        %v1179 = vunpack.c.0.s8 %v1178
        %v1180 = vlaneseq
        %v1181 = vshrl.u32 %v1180, 7
        %v1182 = vsub.s32 %v1179, %v1181
        %v1183 = vrot.slane %v1176, %v1182
        %v1185 = vunpack.c.l.s4 1966171168
        %v1186 = vunpack.c.0.s8 %v1185
        %v1187 = vlaneseq
        %v1188 = vshrl.u32 %v1187, 7
        %v1189 = vsub.s32 %v1186, %v1188
        %v1190 = vrot.slane %v1183, %v1189
        %s1192 = scalar_lea.vmem %s243, 3 [#allocation10]
        %1193 = vst.msk [vmem:[%s1192] ss:$4 sm:$0x3] %vm416, %v1190
        %s1194 = sand.u32 %s81, 1
        %s1195 = scalar_lea.sflag [#allocation4], %s1194
        %s1196 = sand.u32 %s81, 1
        %s1197 = smul.addr %s1196, 8
        %s1198 = scalar_lea.vmem [#allocation7], %s1197
        %s1199 = sand.u32 %s26, 1
        %s1200 = scalar_lea.sflag [#allocation9], %s1199
        %s1201 = sand.u32 %s107, 1
        %s1202 = smul.addr %s1201, 8
        %s1203 = scalar_lea.vmem [#allocation8], %s1202
        %s1204 = sand.u32 %s26, 1
        %s1205 = scalar_lea.sflag [#allocation9], %s1204
        %s1206 = sand.u32 %s133, 1
        %s1207 = smul.addr %s1206, 8
        %s1208 = scalar_lea.vmem [#allocation10], %s1207
        // Predicated region
        $region37: #{tpu_custom_call.1} parent=27 // pred_check
          %p1209 = pneg %p91
        $region38: #{tpu_custom_call.1} parent=27 // pred_check_branch
          %1211 = sbr.rel (%p1209) target = $region40
        $region39: #{tpu_custom_call.1} parent=27 // pred_region
          %s1213 = ssub.s32 128, 128
          %1214 = vsyncadd %s1195, %s1213
          %s1215 = smul.addr %s26, 2
          %s1216 = smul.addr %s1215, 64
          %s1217 = scalar_lea.hbm %s2, %s1216
          %s1219 = sshll.u32 %s1198, 4
          %s1220 = int_to_ptr.vmem [resolvable:$true] %s1219
          %1222 = dma.vmem_to_hbm [thread:$0]  %s1220, 128, %s1217, %s1195
        $region40: #{tpu_custom_call.1} parent=27 // pred_fallthru
          _
        // Predicated region
        $region41: #{tpu_custom_call.1} parent=27 // pred_check
          %p1223 = pneg %p117
        $region42: #{tpu_custom_call.1} parent=27 // pred_check_branch
          %1225 = sbr.rel (%p1223) target = $region44
        $region43: #{tpu_custom_call.1} parent=27 // pred_region
          %s1227 = ssub.s32 128, 128
          %1228 = vsyncadd %s1200, %s1227
          %s1229 = smul.addr %s26, 2
          %s1230 = smul.addr %s1229, 64
          %s1231 = scalar_lea.hbm %s3, %s1230
          %s1233 = sshll.u32 %s1203, 4
          %s1234 = int_to_ptr.vmem [resolvable:$true] %s1233
          %1236 = dma.vmem_to_hbm [thread:$0]  %s1234, 128, %s1231, %s1200
        $region44: #{tpu_custom_call.1} parent=27 // pred_fallthru
          _
        // Predicated region
        $region45: #{tpu_custom_call.1} parent=27 // pred_check
          %p1237 = pneg %p143
        $region46: #{tpu_custom_call.1} parent=27 // pred_check_branch
          %1239 = sbr.rel (%p1237) target = $region48
        $region47: #{tpu_custom_call.1} parent=27 // pred_region
          %s1241 = ssub.s32 128, 128
          %1242 = vsyncadd %s1205, %s1241
          %s1243 = smul.addr %s26, 2
          %s1244 = smul.addr %s1243, 64
          %s1245 = scalar_lea.hbm %s4, %s1244
          %s1247 = sshll.u32 %s1208, 4
          %s1248 = int_to_ptr.vmem [resolvable:$true] %s1247
          %1250 = dma.vmem_to_hbm [thread:$0]  %s1248, 128, %s1245, %s1205
        $region48: #{tpu_custom_call.1} parent=27 // pred_fallthru
          _
      $region28: #{tpu_custom_call.1} parent=5 // pred_fallthru
        _
      %p1251 = scmp.le.s32.totalorder 2, %s21
      // Predicated region
      $region49: #{tpu_custom_call.1} parent=5 // pred_check
        %p1252 = pneg %p1251
      $region50: #{tpu_custom_call.1} parent=5 // pred_check_branch
        %1254 = sbr.rel (%p1252) target = $region52
      $region51: #{tpu_custom_call.1} parent=5 // pred_region
        %s1255 = ssub.s32 %s21, 2
        // Predicated region
        $region53: #{tpu_custom_call.1} parent=51 // pred_check
          %p1256 = pneg %p97
        $region54: #{tpu_custom_call.1} parent=51 // pred_check_branch
          %1258 = sbr.rel (%p1256) target = $region56
        $region55: #{tpu_custom_call.1} parent=51 // pred_region
          %s1259 = sand.u32 %s82, 1
          %s1260 = scalar_lea.sflag [#allocation4], %s1259
          %s1261 = sand.u32 %s82, 1
          %s1262 = smul.addr %s1261, 8
          %s1263 = scalar_lea.vmem [#allocation7], %s1262
          %1264 = dma.done %s1260, 128
        $region56: #{tpu_custom_call.1} parent=51 // pred_fallthru
          _
        // Predicated region
        $region57: #{tpu_custom_call.1} parent=51 // pred_check
          %p1265 = pneg %p123
        $region58: #{tpu_custom_call.1} parent=51 // pred_check_branch
          %1267 = sbr.rel (%p1265) target = $region60
        $region59: #{tpu_custom_call.1} parent=51 // pred_region
          %s1268 = sand.u32 %s27, 1
          %s1269 = scalar_lea.sflag [#allocation9], %s1268
          %s1270 = sand.u32 %s108, 1
          %s1271 = smul.addr %s1270, 8
          %s1272 = scalar_lea.vmem [#allocation8], %s1271
          %1273 = dma.done %s1269, 128
        $region60: #{tpu_custom_call.1} parent=51 // pred_fallthru
          _
        // Predicated region
        $region61: #{tpu_custom_call.1} parent=51 // pred_check
          %p1274 = pneg %p149
        $region62: #{tpu_custom_call.1} parent=51 // pred_check_branch
          %1276 = sbr.rel (%p1274) target = $region64
        $region63: #{tpu_custom_call.1} parent=51 // pred_region
          %s1277 = sand.u32 %s27, 1
          %s1278 = scalar_lea.sflag [#allocation9], %s1277
          %s1279 = sand.u32 %s134, 1
          %s1280 = smul.addr %s1279, 8
          %s1281 = scalar_lea.vmem [#allocation10], %s1280
          %1282 = dma.done %s1278, 128
        $region64: #{tpu_custom_call.1} parent=51 // pred_fallthru
          _
      $region52: #{tpu_custom_call.1} parent=5 // pred_fallthru
        _
    $region6: #{tpu_custom_call.1} parent=1 // loop_footer
      %s25 = sadd.s32 1, %s21
    $region7: #{tpu_custom_call.1} parent=1 // loop_footer_branch
      %20 = sbr.rel target = $region3
    $region8: #{tpu_custom_call.1} parent=1 // loop_exit
      _
    %1283 = vsyncpa [#allocation3], 1
    %s1284 = scalar_lea.sflag [#allocation3], 1
    %1285 = vsyncpa %s1284, 1
    %1286 = vsyncpa [#allocation4], 1
    %s1287 = scalar_lea.sflag [#allocation4], 1
    %1288 = vsyncpa %s1287, 1
    %1289 = vsyncpa [#allocation9], 1
    %s1290 = scalar_lea.sflag [#allocation9], 1
    %1291 = vsyncpa %s1290, 1
    %1292 = vsyncpa [#allocation5], 1
    %s1293 = scalar_lea.sflag [#allocation5], 1
    %1294 = vsyncpa %s1293, 1

</llo_original>
